<compile_context>
chip_gen: v7x
topology: tpu7x:2x2x1
jax: 0.10.0
libtpu: 0.0.40
codegen_flags: <defaults>
</compile_context>

<pallas_src>
import functools

import jax
import jax.numpy as jnp
from jax import lax
from jax.experimental import pallas as pl
from jax.experimental.pallas import tpu as pltpu


def _round_up(v, m):
    return (v + m - 1) // m * m


def _tpu_vmem_budget_bytes():
    """Generation-aware VMEM budget (leave headroom for compiler scratch)."""
    cap = 64 * 1024 * 1024  # conservative fallback (v7x has 64 MiB per TC)
    try:
        info = pltpu.get_tpu_info()
        cap = int(getattr(info, "vmem_capacity_bytes", cap))
    except Exception:
        pass
    return int(min(max(cap * 3 // 4, 32 * 1024 * 1024), 100 * 1024 * 1024))


def _mxu_row_target():
    """Target M rows for the fused input-projection matmul."""
    try:
        kind = jax.devices()[0].device_kind.lower()
    except Exception:
        kind = ""
    return 128 if "v5" in kind else 256  # v5 MXU is 128-wide, v6e/v7x 256-wide


def _slstm_kernel(x_ref, wih_ref, whh_ref, b_ref, wfc_ref, bfc_ref,
                  out_ref, h_sc, c_sc, xw_sc, *, valid_t, valid_o):
    t_blk = pl.program_id(1)                 # time-block index (axis 1)
    bt, hp = h_sc.shape                      # batch-tile rows, lane-padded H
    tb = xw_sc.shape[0] // bt                # timesteps in this block (static)

    # Zero hidden / cell state at the first time-block of each batch tile.
    @pl.when(t_blk == 0)
    def _():
        h_sc[...] = jnp.zeros_like(h_sc)
        c_sc[...] = jnp.zeros_like(c_sc)

    # Fused input projection for ALL tb timesteps of the block: one MXU pass
    # over (tb*bt, Ip) @ (Ip, 4*Hp), staged in a VMEM scratch for the loop.
    xw_sc[...] = (jnp.dot(x_ref[...], wih_ref[...],
                          preferred_element_type=jnp.float32) + b_ref[...])

    whh = whh_ref[...]                       # loop-invariant, hoisted
    t0 = t_blk * tb                          # first global timestep of block

    def step(t, carry):
        h, c = carry
        row = pl.multiple_of(t * bt, bt)
        gates = xw_sc[pl.ds(row, bt), :] + jnp.dot(
            h.astype(whh.dtype), whh, preferred_element_type=jnp.float32)
        # Spiking (Heaviside) gates: spikingjelly convention heaviside(0) == 1.
        spikes = (gates >= 0.0).astype(jnp.float32)
        # Lane-aligned per-gate slices (each hp is a multiple of 128 lanes).
        i_g = spikes[:, 0 * hp:1 * hp]
        f_g = spikes[:, 1 * hp:2 * hp]
        g_g = spikes[:, 2 * hp:3 * hp]
        o_g = spikes[:, 3 * hp:4 * hp]
        c_new = c * f_g + i_g * g_g
        h_new = c_new * o_g
        # Ragged-tail guard: padded timesteps are strict no-ops for h/c.
        valid = (t0 + t) < valid_t
        h = jnp.where(valid, h_new, h)
        c = jnp.where(valid, c_new, c)
        return h, c

    h, c = lax.fori_loop(0, tb, step, (h_sc[...], c_sc[...]),
                         unroll=min(tb, 8))
    h_sc[...] = h
    c_sc[...] = c

    # fc + softmax(dim=1) fused epilogue, only on the last time-block.
    @pl.when(t_blk == pl.num_programs(1) - 1)
    def _():
        logits = (jnp.dot(h.astype(wfc_ref.dtype), wfc_ref[...],
                          preferred_element_type=jnp.float32) + bfc_ref[...])
        col = lax.broadcasted_iota(jnp.int32, logits.shape, 1)
        logits = jnp.where(col < valid_o, logits, -jnp.inf)   # mask padded O
        m = jnp.max(logits, axis=1, keepdims=True)
        e = jnp.exp(logits - m)
        out_ref[...] = e / jnp.sum(e, axis=1, keepdims=True)  # exact normalize


def spiking_lstm_forward(x, w_ih, w_hh, b_ih, b_hh, w_fc, b_fc,
                         compute_dtype=jnp.float32):
    """x: [T, N, I] (seq-major); PyTorch-layout weights:
       w_ih [4H, I], w_hh [4H, H], b_ih/b_hh [4H], w_fc [O, H], b_fc [O].
       Returns softmax probabilities [N, O].
       compute_dtype=f32 keeps the Heaviside pre-activations bit-faithful;
       bf16 is faster on v6e/v7x but may flip spikes near 0."""
    T, N, I = x.shape
    H = w_hh.shape[1]
    O = w_fc.shape[0]

    n_pad = _round_up(max(N, 8), 8)          # full f32 sublane tiles
    Ip = _round_up(I, 128)                   # lane-dense input width
    Hp = _round_up(H, 128)                   # lane-aligned per-gate width
    Op = _round_up(O, 128)                   # lane-dense output store

    # Batch tiling: at most 2 tiles (one per v7x TensorCore) once batch is big.
    if n_pad >= 256 and n_pad % 16 == 0:
        BT = n_pad // 2
    else:
        BT = n_pad
    NB = n_pad // BT

    # Time-block size: fill the MXU M dimension, bounded by the VMEM budget.
    budget = _tpu_vmem_budget_bytes()
    itemsize = jnp.dtype(compute_dtype).itemsize
    per_step = BT * (2 * Ip * itemsize + 4 * Hp * 4)   # 2x-buffered x + xw scratch
    fixed = ((Ip + Hp) * 4 * Hp + Hp * Op + 5 * Hp + Op) * 2 * itemsize \
            + (2 * BT * Hp + BT * Op) * 4
    tb_budget = max(1, (budget // 2 - fixed) // per_step)
    tb = max(1, _mxu_row_target() // BT)
    tb = int(min(tb, T, tb_budget))

    NT = -(-T // tb)                         # cdiv; last block may be ragged
    T_pad = NT * tb

    # ---- wrapper-side layout plumbing only ----
    # x: [T, N, I] -> zero-pad -> batch-tile-major 2D [(NB*T_pad*BT), Ip]
    x_p = jnp.zeros((T_pad, n_pad, Ip), compute_dtype)
    x_p = x_p.at[:T, :N, :I].set(x.astype(compute_dtype))
    x2d = (x_p.reshape(T_pad, NB, BT, Ip)
              .transpose(1, 0, 2, 3)
              .reshape(NB * T_pad * BT, Ip))

    # Per-gate lane-aligned weights: gate k occupies columns [k*Hp, k*Hp + H).
    wih_t = jnp.zeros((Ip, 4 * Hp), compute_dtype)
    whh_t = jnp.zeros((Hp, 4 * Hp), compute_dtype)
    bias = jnp.zeros((1, 4 * Hp), jnp.float32)
    b_sum = (b_ih + b_hh).astype(jnp.float32)
    for k in range(4):
        wih_t = wih_t.at[:I, k * Hp:k * Hp + H].set(
            w_ih[k * H:(k + 1) * H, :].T.astype(compute_dtype))
        whh_t = whh_t.at[:H, k * Hp:k * Hp + H].set(
            w_hh[k * H:(k + 1) * H, :].T.astype(compute_dtype))
        bias = bias.at[0, k * Hp:k * Hp + H].set(b_sum[k * H:(k + 1) * H])

    wfc_t = jnp.zeros((Hp, Op), compute_dtype).at[:H, :O].set(
        w_fc.T.astype(compute_dtype))
    bfc = jnp.zeros((1, Op), jnp.float32).at[0, :O].set(b_fc.astype(jnp.float32))

    kernel = functools.partial(_slstm_kernel, valid_t=T, valid_o=O)

    out = pl.pallas_call(
        kernel,
        out_shape=jax.ShapeDtypeStruct((n_pad, Op), jnp.float32),
        grid_spec=pltpu.PrefetchScalarGridSpec(
            num_scalar_prefetch=0,
            grid=(NB, NT),                                     # (batch, time)
            in_specs=[
                pl.BlockSpec((tb * BT, Ip), lambda b, s: (b * NT + s, 0)),  # x
                pl.BlockSpec((Ip, 4 * Hp), lambda b, s: (0, 0)),   # W_ih^T
                pl.BlockSpec((Hp, 4 * Hp), lambda b, s: (0, 0)),   # W_hh^T
                pl.BlockSpec((1, 4 * Hp), lambda b, s: (0, 0)),    # b_ih + b_hh
                pl.BlockSpec((Hp, Op), lambda b, s: (0, 0)),       # W_fc^T
                pl.BlockSpec((1, Op), lambda b, s: (0, 0)),        # b_fc
            ],
            out_specs=pl.BlockSpec((BT, Op), lambda b, s: (b, 0)),
            scratch_shapes=[
                pltpu.VMEM((BT, Hp), jnp.float32),            # h state
                pltpu.VMEM((BT, Hp), jnp.float32),            # c state
                pltpu.VMEM((tb * BT, 4 * Hp), jnp.float32),   # fused x@W_ih^T
            ],
        ),
        compiler_params=pltpu.CompilerParams(
            dimension_semantics=("parallel", "arbitrary"),    # batch x time
            vmem_limit_bytes=int(budget),
        ),
    )(x2d, wih_t, whh_t, bias, wfc_t, bfc)

    return out[:N, :O]


def _reference(x, w_ih, w_hh, b_ih, b_hh, w_fc, b_fc):
    """Pure-JAX reference matching the PyTorch SpikingLSTM forward."""
    T, N, _ = x.shape
    H = w_hh.shape[1]
    h = jnp.zeros((N, H), jnp.float32)
    c = jnp.zeros((N, H), jnp.float32)
    for t in range(T):
        gates = x[t] @ w_ih.T + b_ih + h @ w_hh.T + b_hh
        spikes = (gates >= 0.0).astype(jnp.float32)
        i, f, g, o = jnp.split(spikes, 4, axis=1)
        c = c * f + i * g
        h = c * o
    logits = h @ w_fc.T + b_fc
    return jax.nn.softmax(logits, axis=1)


if __name__ == "__main__":
    T, N = 8, 2
    input_size, hidden_size, output_size = 16, 32, 10

    key = jax.random.PRNGKey(0)
    kx, k0, k1, k2, k3, k4, k5 = jax.random.split(key, 7)
    k_lstm = 1.0 / jnp.sqrt(jnp.float32(hidden_size))

    x = jax.random.normal(kx, (T, N, input_size), jnp.float32)  # [T, N, I]
    w_ih = jax.random.uniform(k0, (4 * hidden_size, input_size),
                              jnp.float32, -k_lstm, k_lstm)
    w_hh = jax.random.uniform(k1, (4 * hidden_size, hidden_size),
                              jnp.float32, -k_lstm, k_lstm)
    b_ih = jax.random.uniform(k2, (4 * hidden_size,), jnp.float32, -k_lstm, k_lstm)
    b_hh = jax.random.uniform(k3, (4 * hidden_size,), jnp.float32, -k_lstm, k_lstm)
    w_fc = jax.random.uniform(k4, (output_size, hidden_size),
                              jnp.float32, -k_lstm, k_lstm)
    b_fc = jax.random.uniform(k5, (output_size,), jnp.float32, -k_lstm, k_lstm)

    probs = spiking_lstm_forward(x, w_ih, w_hh, b_ih, b_hh, w_fc, b_fc)
    jax.block_until_ready(probs)

    assert probs.shape == (N, output_size)
    assert bool(jnp.all(jnp.isfinite(probs)))
    # rows of a softmax must sum to 1 (exact normalization in the epilogue)
    assert bool(jnp.allclose(jnp.sum(probs, axis=1), 1.0, atol=1e-5))
    # compare against the pure-JAX reference of the PyTorch forward pass
    ref = _reference(x, w_ih, w_hh, b_ih, b_hh, w_fc, b_fc)
    assert bool(jnp.allclose(probs, ref, atol=1e-3)), "mismatch vs reference"
    print("KERNEL_OK")
</pallas_src>

<mosaic_0001>
module attributes {stable_mosaic.version = 11 : i64} {
  func.func @_slstm_kernel(%arg0: i32, %arg1: i32, %arg2: memref<64x128xf32, #tpu.memory_space<vmem>>, %arg3: memref<128x512xf32, #tpu.memory_space<vmem>>, %arg4: memref<128x512xf32, #tpu.memory_space<vmem>>, %arg5: memref<1x512xf32, #tpu.memory_space<vmem>>, %arg6: memref<128x128xf32, #tpu.memory_space<vmem>>, %arg7: memref<1x128xf32, #tpu.memory_space<vmem>>, %arg8: memref<8x128xf32, #tpu.memory_space<vmem>>, %arg9: memref<8x128xf32, #tpu.memory_space<vmem>>, %arg10: memref<8x128xf32, #tpu.memory_space<vmem>>, %arg11: memref<64x512xf32, #tpu.memory_space<vmem>>) attributes {dimension_semantics = [#tpu.dimension_semantics<parallel>, #tpu.dimension_semantics<arbitrary>], iteration_bounds = array<i64: 1, 1>, scalar_prefetch = 0 : i64, scratch_operands = 3 : i64, tpu.core_type = #tpu.core_type<tc>, window_params = [{transform_indices = @transform_0, window_bounds = array<i64: 64, 128>}, {pipeline_mode = #tpu.pipeline_mode<synchronous>, transform_indices = @transform_1, window_bounds = array<i64: 128, 512>}, {pipeline_mode = #tpu.pipeline_mode<synchronous>, transform_indices = @transform_2, window_bounds = array<i64: 128, 512>}, {pipeline_mode = #tpu.pipeline_mode<synchronous>, transform_indices = @transform_3, window_bounds = array<i64: 1, 512>}, {pipeline_mode = #tpu.pipeline_mode<synchronous>, transform_indices = @transform_4, window_bounds = array<i64: 128, 128>}, {pipeline_mode = #tpu.pipeline_mode<synchronous>, transform_indices = @transform_5, window_bounds = array<i64: 1, 128>}, {transform_indices = @transform_6, window_bounds = array<i64: 8, 128>}]} {
    %c0_i32 = arith.constant 0 : i32
    %0 = arith.cmpi eq, %arg1, %c0_i32 : i32
    %1 = arith.extui %0 : i1 to i32
    %c0_i32_0 = arith.constant 0 : i32
    %2 = arith.cmpi ne, %1, %c0_i32_0 : i32
    scf.if %2 {
      %cst_62 = arith.constant 0.000000e+00 : f32
      %195 = vector.broadcast %cst_62 : f32 to vector<8x128xf32>
      %c0_63 = arith.constant 0 : index
      %c0_64 = arith.constant 0 : index
      %196 = vector.load %arg9[%c0_63, %c0_64] : memref<8x128xf32, #tpu.memory_space<vmem>>, vector<8x128xf32>
      tpu.vector_store %arg9[%c0_63, %c0_64], %195 {strides = array<i32>} : memref<8x128xf32, #tpu.memory_space<vmem>>, vector<8x128xf32>,
      %cst_65 = arith.constant 0.000000e+00 : f32
      %197 = vector.broadcast %cst_65 : f32 to vector<8x128xf32>
      %c0_66 = arith.constant 0 : index
      %c0_67 = arith.constant 0 : index
      %198 = vector.load %arg10[%c0_66, %c0_67] : memref<8x128xf32, #tpu.memory_space<vmem>>, vector<8x128xf32>
      tpu.vector_store %arg10[%c0_66, %c0_67], %197 {strides = array<i32>} : memref<8x128xf32, #tpu.memory_space<vmem>>, vector<8x128xf32>,
    } else {
    }
    %c0 = arith.constant 0 : index
    %c0_1 = arith.constant 0 : index
    %3 = vector.load %arg2[%c0, %c0_1] : memref<64x128xf32, #tpu.memory_space<vmem>>, vector<64x128xf32>
    %c0_2 = arith.constant 0 : index
    %c0_3 = arith.constant 0 : index
    %4 = vector.load %arg3[%c0_2, %c0_3] : memref<128x512xf32, #tpu.memory_space<vmem>>, vector<128x512xf32>
    %cst = arith.constant dense<0.000000e+00> : vector<64x512xf32>
    %5 = tpu.matmul %3, %4, %cst {dimension_numbers = #tpu.dot_dimension_numbers<[1], [0], [0], [1], [0, 0, 1, 1], [], []>} : vector<64x128xf32>, vector<128x512xf32>, vector<64x512xf32> -> vector<64x512xf32>
    %c0_4 = arith.constant 0 : index
    %c0_5 = arith.constant 0 : index
    %6 = vector.load %arg5[%c0_4, %c0_5] : memref<1x512xf32, #tpu.memory_space<vmem>>, vector<1x512xf32>
    %7 = vector.broadcast %6 : vector<1x512xf32> to vector<64x512xf32>
    %8 = arith.addf %5, %7 : vector<64x512xf32>
    %c0_6 = arith.constant 0 : index
    %c0_7 = arith.constant 0 : index
    %9 = vector.load %arg11[%c0_6, %c0_7] : memref<64x512xf32, #tpu.memory_space<vmem>>, vector<64x512xf32>
    tpu.vector_store %arg11[%c0_6, %c0_7], %8 {strides = array<i32>} : memref<64x512xf32, #tpu.memory_space<vmem>>, vector<64x512xf32>,
    %c0_8 = arith.constant 0 : index
    %c0_9 = arith.constant 0 : index
    %10 = vector.load %arg4[%c0_8, %c0_9] : memref<128x512xf32, #tpu.memory_space<vmem>>, vector<128x512xf32>
    %c8_i32 = arith.constant 8 : i32
    %11 = arith.muli %arg1, %c8_i32 : i32
    %c0_10 = arith.constant 0 : index
    %c0_11 = arith.constant 0 : index
    %12 = vector.load %arg9[%c0_10, %c0_11] : memref<8x128xf32, #tpu.memory_space<vmem>>, vector<8x128xf32>
    %c0_12 = arith.constant 0 : index
    %c0_13 = arith.constant 0 : index
    %13 = vector.load %arg10[%c0_12, %c0_13] : memref<8x128xf32, #tpu.memory_space<vmem>>, vector<8x128xf32>
    %c0_i32_14 = arith.constant 0 : i32
    %c8_i32_15 = arith.constant 8 : i32
    %14 = arith.muli %c0_i32_14, %c8_i32_15 : i32
    %15 = tpu.assume_multiple %14, 8 : i32
    %16 = arith.index_cast %15 : i32 to index
    %c0_16 = arith.constant 0 : index
    %17 = vector.load %arg11[%16, %c0_16] : memref<64x512xf32, #tpu.memory_space<vmem>>, vector<8x512xf32>
    %cst_17 = arith.constant dense<0.000000e+00> : vector<8x512xf32>
    %18 = tpu.matmul %12, %10, %cst_17 {dimension_numbers = #tpu.dot_dimension_numbers<[1], [0], [0], [1], [0, 0, 1, 1], [], []>} : vector<8x128xf32>, vector<128x512xf32>, vector<8x512xf32> -> vector<8x512xf32>
    %19 = arith.addf %17, %18 : vector<8x512xf32>
    %cst_18 = arith.constant 0.000000e+00 : f32
    %20 = vector.broadcast %cst_18 : f32 to vector<8x512xf32>
    %21 = arith.cmpf oge, %19, %20 : vector<8x512xf32>
    %22 = arith.extui %21 : vector<8x512xi1> to vector<8x512xi32>
    %23 = arith.sitofp %22 : vector<8x512xi32> to vector<8x512xf32>
    %24 = vector.extract_strided_slice %23 {offsets = [0, 0], sizes = [8, 128], strides = [1, 1]} : vector<8x512xf32> to vector<8x128xf32>
    %25 = vector.extract_strided_slice %23 {offsets = [0, 128], sizes = [8, 128], strides = [1, 1]} : vector<8x512xf32> to vector<8x128xf32>
    %26 = vector.extract_strided_slice %23 {offsets = [0, 256], sizes = [8, 128], strides = [1, 1]} : vector<8x512xf32> to vector<8x128xf32>
    %27 = vector.extract_strided_slice %23 {offsets = [0, 384], sizes = [8, 128], strides = [1, 1]} : vector<8x512xf32> to vector<8x128xf32>
    %28 = arith.mulf %13, %25 : vector<8x128xf32>
    %29 = arith.mulf %24, %26 : vector<8x128xf32>
    %30 = arith.addf %28, %29 : vector<8x128xf32>
    %31 = arith.mulf %30, %27 : vector<8x128xf32>
    %32 = arith.addi %11, %c0_i32_14 : i32
    %c8_i32_19 = arith.constant 8 : i32
    %33 = arith.cmpi slt, %32, %c8_i32_19 : i32
    %34 = arith.select %33, %31, %12 : vector<8x128xf32>
    %35 = arith.select %33, %30, %13 : vector<8x128xf32>
    %c1_i32 = arith.constant 1 : i32
    %c8_i32_20 = arith.constant 8 : i32
    %36 = arith.muli %c1_i32, %c8_i32_20 : i32
    %37 = tpu.assume_multiple %36, 8 : i32
    %38 = arith.index_cast %37 : i32 to index
    %c0_21 = arith.constant 0 : index
    %39 = vector.load %arg11[%38, %c0_21] : memref<64x512xf32, #tpu.memory_space<vmem>>, vector<8x512xf32>
    %cst_22 = arith.constant dense<0.000000e+00> : vector<8x512xf32>
    %40 = tpu.matmul %34, %10, %cst_22 {dimension_numbers = #tpu.dot_dimension_numbers<[1], [0], [0], [1], [0, 0, 1, 1], [], []>} : vector<8x128xf32>, vector<128x512xf32>, vector<8x512xf32> -> vector<8x512xf32>
    %41 = arith.addf %39, %40 : vector<8x512xf32>
    %cst_23 = arith.constant 0.000000e+00 : f32
    %42 = vector.broadcast %cst_23 : f32 to vector<8x512xf32>
    %43 = arith.cmpf oge, %41, %42 : vector<8x512xf32>
    %44 = arith.extui %43 : vector<8x512xi1> to vector<8x512xi32>
    %45 = arith.sitofp %44 : vector<8x512xi32> to vector<8x512xf32>
    %46 = vector.extract_strided_slice %45 {offsets = [0, 0], sizes = [8, 128], strides = [1, 1]} : vector<8x512xf32> to vector<8x128xf32>
    %47 = vector.extract_strided_slice %45 {offsets = [0, 128], sizes = [8, 128], strides = [1, 1]} : vector<8x512xf32> to vector<8x128xf32>
    %48 = vector.extract_strided_slice %45 {offsets = [0, 256], sizes = [8, 128], strides = [1, 1]} : vector<8x512xf32> to vector<8x128xf32>
    %49 = vector.extract_strided_slice %45 {offsets = [0, 384], sizes = [8, 128], strides = [1, 1]} : vector<8x512xf32> to vector<8x128xf32>
    %50 = arith.mulf %35, %47 : vector<8x128xf32>
    %51 = arith.mulf %46, %48 : vector<8x128xf32>
    %52 = arith.addf %50, %51 : vector<8x128xf32>
    %53 = arith.mulf %52, %49 : vector<8x128xf32>
    %54 = arith.addi %11, %c1_i32 : i32
    %c8_i32_24 = arith.constant 8 : i32
    %55 = arith.cmpi slt, %54, %c8_i32_24 : i32
    %56 = arith.select %55, %53, %34 : vector<8x128xf32>
    %57 = arith.select %55, %52, %35 : vector<8x128xf32>
    %c2_i32 = arith.constant 2 : i32
    %c8_i32_25 = arith.constant 8 : i32
    %58 = arith.muli %c2_i32, %c8_i32_25 : i32
    %59 = tpu.assume_multiple %58, 8 : i32
    %60 = arith.index_cast %59 : i32 to index
    %c0_26 = arith.constant 0 : index
    %61 = vector.load %arg11[%60, %c0_26] : memref<64x512xf32, #tpu.memory_space<vmem>>, vector<8x512xf32>
    %cst_27 = arith.constant dense<0.000000e+00> : vector<8x512xf32>
    %62 = tpu.matmul %56, %10, %cst_27 {dimension_numbers = #tpu.dot_dimension_numbers<[1], [0], [0], [1], [0, 0, 1, 1], [], []>} : vector<8x128xf32>, vector<128x512xf32>, vector<8x512xf32> -> vector<8x512xf32>
    %63 = arith.addf %61, %62 : vector<8x512xf32>
    %cst_28 = arith.constant 0.000000e+00 : f32
    %64 = vector.broadcast %cst_28 : f32 to vector<8x512xf32>
    %65 = arith.cmpf oge, %63, %64 : vector<8x512xf32>
    %66 = arith.extui %65 : vector<8x512xi1> to vector<8x512xi32>
    %67 = arith.sitofp %66 : vector<8x512xi32> to vector<8x512xf32>
    %68 = vector.extract_strided_slice %67 {offsets = [0, 0], sizes = [8, 128], strides = [1, 1]} : vector<8x512xf32> to vector<8x128xf32>
    %69 = vector.extract_strided_slice %67 {offsets = [0, 128], sizes = [8, 128], strides = [1, 1]} : vector<8x512xf32> to vector<8x128xf32>
    %70 = vector.extract_strided_slice %67 {offsets = [0, 256], sizes = [8, 128], strides = [1, 1]} : vector<8x512xf32> to vector<8x128xf32>
    %71 = vector.extract_strided_slice %67 {offsets = [0, 384], sizes = [8, 128], strides = [1, 1]} : vector<8x512xf32> to vector<8x128xf32>
    %72 = arith.mulf %57, %69 : vector<8x128xf32>
    %73 = arith.mulf %68, %70 : vector<8x128xf32>
    %74 = arith.addf %72, %73 : vector<8x128xf32>
    %75 = arith.mulf %74, %71 : vector<8x128xf32>
    %76 = arith.addi %11, %c2_i32 : i32
    %c8_i32_29 = arith.constant 8 : i32
    %77 = arith.cmpi slt, %76, %c8_i32_29 : i32
    %78 = arith.select %77, %75, %56 : vector<8x128xf32>
    %79 = arith.select %77, %74, %57 : vector<8x128xf32>
    %c3_i32 = arith.constant 3 : i32
    %c8_i32_30 = arith.constant 8 : i32
    %80 = arith.muli %c3_i32, %c8_i32_30 : i32
    %81 = tpu.assume_multiple %80, 8 : i32
    %82 = arith.index_cast %81 : i32 to index
    %c0_31 = arith.constant 0 : index
    %83 = vector.load %arg11[%82, %c0_31] : memref<64x512xf32, #tpu.memory_space<vmem>>, vector<8x512xf32>
    %cst_32 = arith.constant dense<0.000000e+00> : vector<8x512xf32>
    %84 = tpu.matmul %78, %10, %cst_32 {dimension_numbers = #tpu.dot_dimension_numbers<[1], [0], [0], [1], [0, 0, 1, 1], [], []>} : vector<8x128xf32>, vector<128x512xf32>, vector<8x512xf32> -> vector<8x512xf32>
    %85 = arith.addf %83, %84 : vector<8x512xf32>
    %cst_33 = arith.constant 0.000000e+00 : f32
    %86 = vector.broadcast %cst_33 : f32 to vector<8x512xf32>
    %87 = arith.cmpf oge, %85, %86 : vector<8x512xf32>
    %88 = arith.extui %87 : vector<8x512xi1> to vector<8x512xi32>
    %89 = arith.sitofp %88 : vector<8x512xi32> to vector<8x512xf32>
    %90 = vector.extract_strided_slice %89 {offsets = [0, 0], sizes = [8, 128], strides = [1, 1]} : vector<8x512xf32> to vector<8x128xf32>
    %91 = vector.extract_strided_slice %89 {offsets = [0, 128], sizes = [8, 128], strides = [1, 1]} : vector<8x512xf32> to vector<8x128xf32>
    %92 = vector.extract_strided_slice %89 {offsets = [0, 256], sizes = [8, 128], strides = [1, 1]} : vector<8x512xf32> to vector<8x128xf32>
    %93 = vector.extract_strided_slice %89 {offsets = [0, 384], sizes = [8, 128], strides = [1, 1]} : vector<8x512xf32> to vector<8x128xf32>
    %94 = arith.mulf %79, %91 : vector<8x128xf32>
    %95 = arith.mulf %90, %92 : vector<8x128xf32>
    %96 = arith.addf %94, %95 : vector<8x128xf32>
    %97 = arith.mulf %96, %93 : vector<8x128xf32>
    %98 = arith.addi %11, %c3_i32 : i32
    %c8_i32_34 = arith.constant 8 : i32
    %99 = arith.cmpi slt, %98, %c8_i32_34 : i32
    %100 = arith.select %99, %97, %78 : vector<8x128xf32>
    %101 = arith.select %99, %96, %79 : vector<8x128xf32>
    %c4_i32 = arith.constant 4 : i32
    %c8_i32_35 = arith.constant 8 : i32
    %102 = arith.muli %c4_i32, %c8_i32_35 : i32
    %103 = tpu.assume_multiple %102, 8 : i32
    %104 = arith.index_cast %103 : i32 to index
    %c0_36 = arith.constant 0 : index
    %105 = vector.load %arg11[%104, %c0_36] : memref<64x512xf32, #tpu.memory_space<vmem>>, vector<8x512xf32>
    %cst_37 = arith.constant dense<0.000000e+00> : vector<8x512xf32>
    %106 = tpu.matmul %100, %10, %cst_37 {dimension_numbers = #tpu.dot_dimension_numbers<[1], [0], [0], [1], [0, 0, 1, 1], [], []>} : vector<8x128xf32>, vector<128x512xf32>, vector<8x512xf32> -> vector<8x512xf32>
    %107 = arith.addf %105, %106 : vector<8x512xf32>
    %cst_38 = arith.constant 0.000000e+00 : f32
    %108 = vector.broadcast %cst_38 : f32 to vector<8x512xf32>
    %109 = arith.cmpf oge, %107, %108 : vector<8x512xf32>
    %110 = arith.extui %109 : vector<8x512xi1> to vector<8x512xi32>
    %111 = arith.sitofp %110 : vector<8x512xi32> to vector<8x512xf32>
    %112 = vector.extract_strided_slice %111 {offsets = [0, 0], sizes = [8, 128], strides = [1, 1]} : vector<8x512xf32> to vector<8x128xf32>
    %113 = vector.extract_strided_slice %111 {offsets = [0, 128], sizes = [8, 128], strides = [1, 1]} : vector<8x512xf32> to vector<8x128xf32>
    %114 = vector.extract_strided_slice %111 {offsets = [0, 256], sizes = [8, 128], strides = [1, 1]} : vector<8x512xf32> to vector<8x128xf32>
    %115 = vector.extract_strided_slice %111 {offsets = [0, 384], sizes = [8, 128], strides = [1, 1]} : vector<8x512xf32> to vector<8x128xf32>
    %116 = arith.mulf %101, %113 : vector<8x128xf32>
    %117 = arith.mulf %112, %114 : vector<8x128xf32>
    %118 = arith.addf %116, %117 : vector<8x128xf32>
    %119 = arith.mulf %118, %115 : vector<8x128xf32>
    %120 = arith.addi %11, %c4_i32 : i32
    %c8_i32_39 = arith.constant 8 : i32
    %121 = arith.cmpi slt, %120, %c8_i32_39 : i32
    %122 = arith.select %121, %119, %100 : vector<8x128xf32>
    %123 = arith.select %121, %118, %101 : vector<8x128xf32>
    %c5_i32 = arith.constant 5 : i32
    %c8_i32_40 = arith.constant 8 : i32
    %124 = arith.muli %c5_i32, %c8_i32_40 : i32
    %125 = tpu.assume_multiple %124, 8 : i32
    %126 = arith.index_cast %125 : i32 to index
    %c0_41 = arith.constant 0 : index
    %127 = vector.load %arg11[%126, %c0_41] : memref<64x512xf32, #tpu.memory_space<vmem>>, vector<8x512xf32>
    %cst_42 = arith.constant dense<0.000000e+00> : vector<8x512xf32>
    %128 = tpu.matmul %122, %10, %cst_42 {dimension_numbers = #tpu.dot_dimension_numbers<[1], [0], [0], [1], [0, 0, 1, 1], [], []>} : vector<8x128xf32>, vector<128x512xf32>, vector<8x512xf32> -> vector<8x512xf32>
    %129 = arith.addf %127, %128 : vector<8x512xf32>
    %cst_43 = arith.constant 0.000000e+00 : f32
    %130 = vector.broadcast %cst_43 : f32 to vector<8x512xf32>
    %131 = arith.cmpf oge, %129, %130 : vector<8x512xf32>
    %132 = arith.extui %131 : vector<8x512xi1> to vector<8x512xi32>
    %133 = arith.sitofp %132 : vector<8x512xi32> to vector<8x512xf32>
    %134 = vector.extract_strided_slice %133 {offsets = [0, 0], sizes = [8, 128], strides = [1, 1]} : vector<8x512xf32> to vector<8x128xf32>
    %135 = vector.extract_strided_slice %133 {offsets = [0, 128], sizes = [8, 128], strides = [1, 1]} : vector<8x512xf32> to vector<8x128xf32>
    %136 = vector.extract_strided_slice %133 {offsets = [0, 256], sizes = [8, 128], strides = [1, 1]} : vector<8x512xf32> to vector<8x128xf32>
    %137 = vector.extract_strided_slice %133 {offsets = [0, 384], sizes = [8, 128], strides = [1, 1]} : vector<8x512xf32> to vector<8x128xf32>
    %138 = arith.mulf %123, %135 : vector<8x128xf32>
    %139 = arith.mulf %134, %136 : vector<8x128xf32>
    %140 = arith.addf %138, %139 : vector<8x128xf32>
    %141 = arith.mulf %140, %137 : vector<8x128xf32>
    %142 = arith.addi %11, %c5_i32 : i32
    %c8_i32_44 = arith.constant 8 : i32
    %143 = arith.cmpi slt, %142, %c8_i32_44 : i32
    %144 = arith.select %143, %141, %122 : vector<8x128xf32>
    %145 = arith.select %143, %140, %123 : vector<8x128xf32>
    %c6_i32 = arith.constant 6 : i32
    %c8_i32_45 = arith.constant 8 : i32
    %146 = arith.muli %c6_i32, %c8_i32_45 : i32
    %147 = tpu.assume_multiple %146, 8 : i32
    %148 = arith.index_cast %147 : i32 to index
    %c0_46 = arith.constant 0 : index
    %149 = vector.load %arg11[%148, %c0_46] : memref<64x512xf32, #tpu.memory_space<vmem>>, vector<8x512xf32>
    %cst_47 = arith.constant dense<0.000000e+00> : vector<8x512xf32>
    %150 = tpu.matmul %144, %10, %cst_47 {dimension_numbers = #tpu.dot_dimension_numbers<[1], [0], [0], [1], [0, 0, 1, 1], [], []>} : vector<8x128xf32>, vector<128x512xf32>, vector<8x512xf32> -> vector<8x512xf32>
    %151 = arith.addf %149, %150 : vector<8x512xf32>
    %cst_48 = arith.constant 0.000000e+00 : f32
    %152 = vector.broadcast %cst_48 : f32 to vector<8x512xf32>
    %153 = arith.cmpf oge, %151, %152 : vector<8x512xf32>
    %154 = arith.extui %153 : vector<8x512xi1> to vector<8x512xi32>
    %155 = arith.sitofp %154 : vector<8x512xi32> to vector<8x512xf32>
    %156 = vector.extract_strided_slice %155 {offsets = [0, 0], sizes = [8, 128], strides = [1, 1]} : vector<8x512xf32> to vector<8x128xf32>
    %157 = vector.extract_strided_slice %155 {offsets = [0, 128], sizes = [8, 128], strides = [1, 1]} : vector<8x512xf32> to vector<8x128xf32>
    %158 = vector.extract_strided_slice %155 {offsets = [0, 256], sizes = [8, 128], strides = [1, 1]} : vector<8x512xf32> to vector<8x128xf32>
    %159 = vector.extract_strided_slice %155 {offsets = [0, 384], sizes = [8, 128], strides = [1, 1]} : vector<8x512xf32> to vector<8x128xf32>
    %160 = arith.mulf %145, %157 : vector<8x128xf32>
    %161 = arith.mulf %156, %158 : vector<8x128xf32>
    %162 = arith.addf %160, %161 : vector<8x128xf32>
    %163 = arith.mulf %162, %159 : vector<8x128xf32>
    %164 = arith.addi %11, %c6_i32 : i32
    %c8_i32_49 = arith.constant 8 : i32
    %165 = arith.cmpi slt, %164, %c8_i32_49 : i32
    %166 = arith.select %165, %163, %144 : vector<8x128xf32>
    %167 = arith.select %165, %162, %145 : vector<8x128xf32>
    %c7_i32 = arith.constant 7 : i32
    %c8_i32_50 = arith.constant 8 : i32
    %168 = arith.muli %c7_i32, %c8_i32_50 : i32
    %169 = tpu.assume_multiple %168, 8 : i32
    %170 = arith.index_cast %169 : i32 to index
    %c0_51 = arith.constant 0 : index
    %171 = vector.load %arg11[%170, %c0_51] : memref<64x512xf32, #tpu.memory_space<vmem>>, vector<8x512xf32>
    %cst_52 = arith.constant dense<0.000000e+00> : vector<8x512xf32>
    %172 = tpu.matmul %166, %10, %cst_52 {dimension_numbers = #tpu.dot_dimension_numbers<[1], [0], [0], [1], [0, 0, 1, 1], [], []>} : vector<8x128xf32>, vector<128x512xf32>, vector<8x512xf32> -> vector<8x512xf32>
    %173 = arith.addf %171, %172 : vector<8x512xf32>
    %cst_53 = arith.constant 0.000000e+00 : f32
    %174 = vector.broadcast %cst_53 : f32 to vector<8x512xf32>
    %175 = arith.cmpf oge, %173, %174 : vector<8x512xf32>
    %176 = arith.extui %175 : vector<8x512xi1> to vector<8x512xi32>
    %177 = arith.sitofp %176 : vector<8x512xi32> to vector<8x512xf32>
    %178 = vector.extract_strided_slice %177 {offsets = [0, 0], sizes = [8, 128], strides = [1, 1]} : vector<8x512xf32> to vector<8x128xf32>
    %179 = vector.extract_strided_slice %177 {offsets = [0, 128], sizes = [8, 128], strides = [1, 1]} : vector<8x512xf32> to vector<8x128xf32>
    %180 = vector.extract_strided_slice %177 {offsets = [0, 256], sizes = [8, 128], strides = [1, 1]} : vector<8x512xf32> to vector<8x128xf32>
    %181 = vector.extract_strided_slice %177 {offsets = [0, 384], sizes = [8, 128], strides = [1, 1]} : vector<8x512xf32> to vector<8x128xf32>
    %182 = arith.mulf %167, %179 : vector<8x128xf32>
    %183 = arith.mulf %178, %180 : vector<8x128xf32>
    %184 = arith.addf %182, %183 : vector<8x128xf32>
    %185 = arith.mulf %184, %181 : vector<8x128xf32>
    %186 = arith.addi %11, %c7_i32 : i32
    %c8_i32_54 = arith.constant 8 : i32
    %187 = arith.cmpi slt, %186, %c8_i32_54 : i32
    %188 = arith.select %187, %185, %166 : vector<8x128xf32>
    %189 = arith.select %187, %184, %167 : vector<8x128xf32>
    %c8_i32_55 = arith.constant 8 : i32
    %c0_56 = arith.constant 0 : index
    %c0_57 = arith.constant 0 : index
    %190 = vector.load %arg9[%c0_56, %c0_57] : memref<8x128xf32, #tpu.memory_space<vmem>>, vector<8x128xf32>
    tpu.vector_store %arg9[%c0_56, %c0_57], %188 {strides = array<i32>} : memref<8x128xf32, #tpu.memory_space<vmem>>, vector<8x128xf32>,
    %c0_58 = arith.constant 0 : index
    %c0_59 = arith.constant 0 : index
    %191 = vector.load %arg10[%c0_58, %c0_59] : memref<8x128xf32, #tpu.memory_space<vmem>>, vector<8x128xf32>
    tpu.vector_store %arg10[%c0_58, %c0_59], %189 {strides = array<i32>} : memref<8x128xf32, #tpu.memory_space<vmem>>, vector<8x128xf32>,
    %c0_i32_60 = arith.constant 0 : i32
    %192 = arith.cmpi eq, %arg1, %c0_i32_60 : i32
    %193 = arith.extui %192 : i1 to i32
    %c0_i32_61 = arith.constant 0 : i32
    %194 = arith.cmpi ne, %193, %c0_i32_61 : i32
    scf.if %194 {
      %c0_62 = arith.constant 0 : index
      %c0_63 = arith.constant 0 : index
      %195 = vector.load %arg6[%c0_62, %c0_63] : memref<128x128xf32, #tpu.memory_space<vmem>>, vector<128x128xf32>
      %cst_64 = arith.constant dense<0.000000e+00> : vector<8x128xf32>
      %196 = tpu.matmul %188, %195, %cst_64 {dimension_numbers = #tpu.dot_dimension_numbers<[1], [0], [0], [1], [0, 0, 1, 1], [], []>} : vector<8x128xf32>, vector<128x128xf32>, vector<8x128xf32> -> vector<8x128xf32>
      %c0_65 = arith.constant 0 : index
      %c0_66 = arith.constant 0 : index
      %197 = vector.load %arg7[%c0_65, %c0_66] : memref<1x128xf32, #tpu.memory_space<vmem>>, vector<1x128xf32>
      %198 = vector.broadcast %197 : vector<1x128xf32> to vector<8x128xf32>
      %199 = arith.addf %196, %198 : vector<8x128xf32>
      %200 = tpu.iota {dimensions = array<i32: 1>} : vector<8x128xi32>
      %c10_i32 = arith.constant 10 : i32
      %201 = vector.broadcast %c10_i32 : i32 to vector<8x128xi32>
      %202 = arith.cmpi slt, %200, %201 : vector<8x128xi32>
      %cst_67 = arith.constant 0xFF800000 : f32
      %203 = vector.broadcast %cst_67 : f32 to vector<8x128xf32>
      %204 = arith.select %202, %199, %203 : vector<8x128xi1>, vector<8x128xf32>
      %cst_68 = arith.constant dense<0xFF800000> : vector<8xf32>
      %205 = vector.multi_reduction <maximumf>, %204, %cst_68 [1] : vector<8x128xf32> to vector<8xf32>
      %206 = vector.shape_cast %205 : vector<8xf32> to vector<8x1xf32>
      %207 = vector.broadcast %206 : vector<8x1xf32> to vector<8x128xf32>
      %208 = arith.subf %204, %207 : vector<8x128xf32>
      %209 = math.exp %208 : vector<8x128xf32>
      %cst_69 = arith.constant dense<0.000000e+00> : vector<8xf32>
      %210 = vector.multi_reduction <add>, %209, %cst_69 [1] : vector<8x128xf32> to vector<8xf32>
      %211 = vector.shape_cast %210 : vector<8xf32> to vector<8x1xf32>
      %212 = vector.broadcast %211 : vector<8x1xf32> to vector<8x128xf32>
      %213 = arith.divf %209, %212 : vector<8x128xf32>
      %c0_70 = arith.constant 0 : index
      %c0_71 = arith.constant 0 : index
      %214 = vector.load %arg8[%c0_70, %c0_71] : memref<8x128xf32, #tpu.memory_space<vmem>>, vector<8x128xf32>
      tpu.vector_store %arg8[%c0_70, %c0_71], %213 {strides = array<i32>} : memref<8x128xf32, #tpu.memory_space<vmem>>, vector<8x128xf32>,
    } else {
    }
    return
  }
  func.func @transform_0(%arg0: i32, %arg1: i32) -> (i32, i32) {
    %c1_i32 = arith.constant 1 : i32
    %0 = arith.muli %arg0, %c1_i32 : i32
    %1 = arith.addi %0, %arg1 : i32
    %c0_i32 = arith.constant 0 : i32
    %c0_i32_0 = arith.constant 0 : i32
    return %1, %c0_i32 : i32, i32
  }
  func.func @transform_1(%arg0: i32, %arg1: i32) -> (i32, i32) {
    %c0_i32 = arith.constant 0 : i32
    %c0_i32_0 = arith.constant 0 : i32
    %c0_i32_1 = arith.constant 0 : i32
    return %c0_i32, %c0_i32_0 : i32, i32
  }
  func.func @transform_2(%arg0: i32, %arg1: i32) -> (i32, i32) {
    %c0_i32 = arith.constant 0 : i32
    %c0_i32_0 = arith.constant 0 : i32
    %c0_i32_1 = arith.constant 0 : i32
    return %c0_i32, %c0_i32_0 : i32, i32
  }
  func.func @transform_3(%arg0: i32, %arg1: i32) -> (i32, i32) {
    %c0_i32 = arith.constant 0 : i32
    %c0_i32_0 = arith.constant 0 : i32
    %c0_i32_1 = arith.constant 0 : i32
    return %c0_i32, %c0_i32_0 : i32, i32
  }
  func.func @transform_4(%arg0: i32, %arg1: i32) -> (i32, i32) {
    %c0_i32 = arith.constant 0 : i32
    %c0_i32_0 = arith.constant 0 : i32
    %c0_i32_1 = arith.constant 0 : i32
    return %c0_i32, %c0_i32_0 : i32, i32
  }
  func.func @transform_5(%arg0: i32, %arg1: i32) -> (i32, i32) {
    %c0_i32 = arith.constant 0 : i32
    %c0_i32_0 = arith.constant 0 : i32
    %c0_i32_1 = arith.constant 0 : i32
    return %c0_i32, %c0_i32_0 : i32, i32
  }
  func.func @transform_6(%arg0: i32, %arg1: i32) -> (i32, i32) {
    %c0_i32 = arith.constant 0 : i32
    %c0_i32_0 = arith.constant 0 : i32
    return %arg0, %c0_i32 : i32, i32
  }
}

</mosaic_0001>

<llo_original>
// kernel: tpu_custom_call.1
$region0: #{tpu_custom_call.1}
  #allocation0 [shape = 'u32[]', space=smem, size = 0x4, offset = 0x4, fixed_abs, tag = 'smem constant byte address 0x4 - core index']
  #allocation1 [shape = 'u32[144,128]{1,0:T(1,128)}', space=vmem, size = 0x12000, scoped, tag = 'internal scratch']
  #allocation2 [shape = 'f32[8,128]{1,0:T(8,128)}', space=vmem, size = 0x1000, scoped, tag = 'scratch operand']
  #allocation3 [shape = 'f32[8,128]{1,0:T(8,128)}', space=vmem, size = 0x1000, scoped, tag = 'scratch operand']
  #allocation4 [shape = 'f32[64,512]{1,0:T(8,128)}', space=vmem, size = 0x20000, scoped, tag = 'scratch operand']
  %s0 = inlined_call_operand.hbm [shape: f32[64,128], index: 0, kind: input, shape index: {}]
  %s1 = inlined_call_operand.hbm [shape: f32[128,512], index: 1, kind: input, shape index: {}]
  %s2 = inlined_call_operand.hbm [shape: f32[128,512], index: 2, kind: input, shape index: {}]
  %s3 = inlined_call_operand.vmem [shape: f32[1,512], index: 3, kind: input, shape index: {}]
  %s4 = inlined_call_operand.hbm [shape: f32[128,128], index: 4, kind: input, shape index: {}]
  %s5 = inlined_call_operand.vmem [shape: f32[1,128], index: 5, kind: input, shape index: {}]
  %s6 = inlined_call_operand.hbm [shape: f32[8,128], index: 6, kind: output, shape index: {}]
  %s7 = sld [smem:[#allocation0]]
  $region58: #{tpu_custom_call.1} parent=0
    _
  %s9 = ssub.s32 1, %s7
  %s10 = scalar_select 0, %s9, %s7
  $region1: #{tpu_custom_call.1} parent=0
    #allocation5 [shape = 'u8[32768]{0}', space=vmem, size = 0x8000, scoped, tag = 'input window, operand 0, single buffered']
    #allocation6 [shape = 's32[1]{0}', space=sflag, size = 0x4, scoped, tag = 'scoped memory for tpu_custom_call.1']
    #allocation7 [shape = 's32[1]{0}', space=sflag, size = 0x4, scoped, tag = 'scoped memory for tpu_custom_call.1']
    #allocation8 [shape = 'u8[262144]{0}', space=vmem, size = 0x40000, scoped, tag = 'input window, operand 1, single buffered']
    #allocation9 [shape = 's32[1]{0}', space=sflag, size = 0x4, scoped, tag = 'scoped memory for tpu_custom_call.1']
    #allocation10 [shape = 'u8[262144]{0}', space=vmem, size = 0x40000, scoped, tag = 'input window, operand 2, single buffered']
    #allocation11 [shape = 'u8[65536]{0}', space=vmem, size = 0x10000, scoped, tag = 'input window, operand 4, single buffered']
    #allocation12 [shape = 's32[1]{0}', space=sflag, size = 0x4, scoped, tag = 'scoped memory for tpu_custom_call.1']
    #allocation13 [shape = 'u8[4096]{0}', space=vmem, size = 0x1000, scoped, tag = 'output window, operand 0, single buffered']
    %11 = vsyncpa [#allocation6], 0
    %12 = vsyncpa [#allocation9], 0
    %13 = vsyncpa [#allocation12], 0
    %14 = vsyncpa [#allocation7], 0
    // Predicated region
    $region2: #{tpu_custom_call.1} parent=1 // pred_check
      _
    $region3: #{tpu_custom_call.1} parent=1 // pred_check_branch
      %16 = sbr.rel (0) target = $region5
    $region4: #{tpu_custom_call.1} parent=1 // pred_region
      %s17 = sadd.s32 0, 0
      %s18 = smul.u32 8, %s17
      %s20 = ssub.s32 1024, 1024
      %21 = vsyncadd [#allocation6], %s20
      %s22 = smul.addr %s18, 128
      %s23 = scalar_lea.hbm %s0, %s22
      %s24 = sshll.u32 [#allocation5], 4
      %s25 = int_to_ptr.vmem [resolvable:$true] %s24
      %30 = dma.hbm_to_vmem [thread:$0]  %s23, 1024, %s25, [#allocation6], 128, 128, 8
    $region5: #{tpu_custom_call.1} parent=1 // pred_fallthru
      _
    // Predicated region
    $region6: #{tpu_custom_call.1} parent=1 // pred_check
      _
    $region7: #{tpu_custom_call.1} parent=1 // pred_check_branch
      %32 = sbr.rel (0) target = $region9
    $region8: #{tpu_custom_call.1} parent=1 // pred_region
      %s34 = ssub.s32 8192, 8192
      %35 = vsyncadd [#allocation9], %s34
      %s36 = sshll.u32 [#allocation8], 4
      %s37 = int_to_ptr.vmem [resolvable:$true] %s36
      %42 = dma.hbm_to_vmem [thread:$0]  %s1, 8192, %s37, [#allocation9], 512, 512, 32
    $region9: #{tpu_custom_call.1} parent=1 // pred_fallthru
      _
    // Predicated region
    $region10: #{tpu_custom_call.1} parent=1 // pred_check
      _
    $region11: #{tpu_custom_call.1} parent=1 // pred_check_branch
      %44 = sbr.rel (0) target = $region13
    $region12: #{tpu_custom_call.1} parent=1 // pred_region
      %s46 = ssub.s32 8192, 8192
      %47 = vsyncadd [#allocation9], %s46
      %s48 = sshll.u32 [#allocation10], 4
      %s49 = int_to_ptr.vmem [resolvable:$true] %s48
      %54 = dma.hbm_to_vmem [thread:$0]  %s2, 8192, %s49, [#allocation9], 512, 512, 32
    $region13: #{tpu_custom_call.1} parent=1 // pred_fallthru
      _
    // Predicated region
    $region14: #{tpu_custom_call.1} parent=1 // pred_check
      _
    $region15: #{tpu_custom_call.1} parent=1 // pred_check_branch
      %56 = sbr.rel (0) target = $region17
    $region16: #{tpu_custom_call.1} parent=1 // pred_region
      _
    $region17: #{tpu_custom_call.1} parent=1 // pred_fallthru
      _
    // Predicated region
    $region18: #{tpu_custom_call.1} parent=1 // pred_check
      _
    $region19: #{tpu_custom_call.1} parent=1 // pred_check_branch
      %58 = sbr.rel (0) target = $region21
    $region20: #{tpu_custom_call.1} parent=1 // pred_region
      %s60 = ssub.s32 2048, 2048
      %61 = vsyncadd [#allocation12], %s60
      %s62 = sshll.u32 [#allocation11], 4
      %s63 = int_to_ptr.vmem [resolvable:$true] %s62
      %68 = dma.hbm_to_vmem [thread:$0]  %s4, 2048, %s63, [#allocation12], 128, 128, 8
    $region21: #{tpu_custom_call.1} parent=1 // pred_fallthru
      _
    // Predicated region
    $region22: #{tpu_custom_call.1} parent=1 // pred_check
      _
    $region23: #{tpu_custom_call.1} parent=1 // pred_check_branch
      %70 = sbr.rel (0) target = $region25
    $region24: #{tpu_custom_call.1} parent=1 // pred_region
      _
    $region25: #{tpu_custom_call.1} parent=1 // pred_fallthru
      _
    // Predicated region
    $region26: #{tpu_custom_call.1} parent=1 // pred_check
      _
    $region27: #{tpu_custom_call.1} parent=1 // pred_check_branch
      %72 = sbr.rel (0) target = $region29
    $region28: #{tpu_custom_call.1} parent=1 // pred_region
      %73 = dma.done [#allocation6], 1024
    $region29: #{tpu_custom_call.1} parent=1 // pred_fallthru
      _
    // Predicated region
    $region30: #{tpu_custom_call.1} parent=1 // pred_check
      _
    $region31: #{tpu_custom_call.1} parent=1 // pred_check_branch
      %75 = sbr.rel (0) target = $region33
    $region32: #{tpu_custom_call.1} parent=1 // pred_region
      %76 = dma.done [#allocation9], 8192
    $region33: #{tpu_custom_call.1} parent=1 // pred_fallthru
      _
    // Predicated region
    $region34: #{tpu_custom_call.1} parent=1 // pred_check
      _
    $region35: #{tpu_custom_call.1} parent=1 // pred_check_branch
      %78 = sbr.rel (0) target = $region37
    $region36: #{tpu_custom_call.1} parent=1 // pred_region
      %79 = dma.done [#allocation9], 8192
    $region37: #{tpu_custom_call.1} parent=1 // pred_fallthru
      _
    // Predicated region
    $region38: #{tpu_custom_call.1} parent=1 // pred_check
      _
    $region39: #{tpu_custom_call.1} parent=1 // pred_check_branch
      %81 = sbr.rel (0) target = $region41
    $region40: #{tpu_custom_call.1} parent=1 // pred_region
      %82 = dma.done [#allocation12], 2048
    $region41: #{tpu_custom_call.1} parent=1 // pred_fallthru
      _
    %s83 = sadd.s32 0, 0
    %s84 = smul.u32 8, %s83
    %p85 = scmp.eq.s32.totalorder 0, 0
    // Predicated region
    $region42: #{tpu_custom_call.1} parent=1 // pred_check
      %p86 = pneg %p85
    $region43: #{tpu_custom_call.1} parent=1 // pred_check_branch
      %88 = sbr.rel (%p86) target = $region45
    $region44: #{tpu_custom_call.1} parent=1 // pred_region
      %89 = vst [vmem:[#allocation2] sm:$0xff] 0.0
      %90 = vst [vmem:[#allocation3] sm:$0xff] 0.0
    $region45: #{tpu_custom_call.1} parent=1 // pred_fallthru
      _
    %v91 = vld [vmem:[#allocation5] sm:$0xff]
    %v92 = vld [vmem:[#allocation5 + $0x8] sm:$0xff]
    %v93 = vld [vmem:[#allocation5 + $0x10] sm:$0xff]
    %v94 = vld [vmem:[#allocation5 + $0x18] sm:$0xff]
    %v95 = vld [vmem:[#allocation5 + $0x20] sm:$0xff]
    %v96 = vld [vmem:[#allocation5 + $0x28] sm:$0xff]
    %v97 = vld [vmem:[#allocation5 + $0x30] sm:$0xff]
    %v98 = vld [vmem:[#allocation5 + $0x38] sm:$0xff]
    %v99 = vld [vmem:[#allocation8] sm:$0xff]
    %v100 = vld [vmem:[#allocation8 + $0x8] sm:$0xff]
    %v101 = vld [vmem:[#allocation8 + $0x10] sm:$0xff]
    %v102 = vld [vmem:[#allocation8 + $0x18] sm:$0xff]
    %v103 = vld [vmem:[#allocation8 + $0x20] sm:$0xff]
    %v104 = vld [vmem:[#allocation8 + $0x28] sm:$0xff]
    %v105 = vld [vmem:[#allocation8 + $0x30] sm:$0xff]
    %v106 = vld [vmem:[#allocation8 + $0x38] sm:$0xff]
    %v107 = vld [vmem:[#allocation8 + $0x40] sm:$0xff]
    %v108 = vld [vmem:[#allocation8 + $0x48] sm:$0xff]
    %v109 = vld [vmem:[#allocation8 + $0x50] sm:$0xff]
    %v110 = vld [vmem:[#allocation8 + $0x58] sm:$0xff]
    %v111 = vld [vmem:[#allocation8 + $0x60] sm:$0xff]
    %v112 = vld [vmem:[#allocation8 + $0x68] sm:$0xff]
    %v113 = vld [vmem:[#allocation8 + $0x70] sm:$0xff]
    %v114 = vld [vmem:[#allocation8 + $0x78] sm:$0xff]
    %v115 = vld [vmem:[#allocation8 + $0x80] sm:$0xff]
    %v116 = vld [vmem:[#allocation8 + $0x88] sm:$0xff]
    %v117 = vld [vmem:[#allocation8 + $0x90] sm:$0xff]
    %v118 = vld [vmem:[#allocation8 + $0x98] sm:$0xff]
    %v119 = vld [vmem:[#allocation8 + $0xa0] sm:$0xff]
    %v120 = vld [vmem:[#allocation8 + $0xa8] sm:$0xff]
    %v121 = vld [vmem:[#allocation8 + $0xb0] sm:$0xff]
    %v122 = vld [vmem:[#allocation8 + $0xb8] sm:$0xff]
    %v123 = vld [vmem:[#allocation8 + $0xc0] sm:$0xff]
    %v124 = vld [vmem:[#allocation8 + $0xc8] sm:$0xff]
    %v125 = vld [vmem:[#allocation8 + $0xd0] sm:$0xff]
    %v126 = vld [vmem:[#allocation8 + $0xd8] sm:$0xff]
    %v127 = vld [vmem:[#allocation8 + $0xe0] sm:$0xff]
    %v128 = vld [vmem:[#allocation8 + $0xe8] sm:$0xff]
    %v129 = vld [vmem:[#allocation8 + $0xf0] sm:$0xff]
    %v130 = vld [vmem:[#allocation8 + $0xf8] sm:$0xff]
    %v131 = vld [vmem:[#allocation8 + $0x100] sm:$0xff]
    %v132 = vld [vmem:[#allocation8 + $0x108] sm:$0xff]
    %v133 = vld [vmem:[#allocation8 + $0x110] sm:$0xff]
    %v134 = vld [vmem:[#allocation8 + $0x118] sm:$0xff]
    %v135 = vld [vmem:[#allocation8 + $0x120] sm:$0xff]
    %v136 = vld [vmem:[#allocation8 + $0x128] sm:$0xff]
    %v137 = vld [vmem:[#allocation8 + $0x130] sm:$0xff]
    %v138 = vld [vmem:[#allocation8 + $0x138] sm:$0xff]
    %v139 = vld [vmem:[#allocation8 + $0x140] sm:$0xff]
    %v140 = vld [vmem:[#allocation8 + $0x148] sm:$0xff]
    %v141 = vld [vmem:[#allocation8 + $0x150] sm:$0xff]
    %v142 = vld [vmem:[#allocation8 + $0x158] sm:$0xff]
    %v143 = vld [vmem:[#allocation8 + $0x160] sm:$0xff]
    %v144 = vld [vmem:[#allocation8 + $0x168] sm:$0xff]
    %v145 = vld [vmem:[#allocation8 + $0x170] sm:$0xff]
    %v146 = vld [vmem:[#allocation8 + $0x178] sm:$0xff]
    %v147 = vld [vmem:[#allocation8 + $0x180] sm:$0xff]
    %v148 = vld [vmem:[#allocation8 + $0x188] sm:$0xff]
    %v149 = vld [vmem:[#allocation8 + $0x190] sm:$0xff]
    %v150 = vld [vmem:[#allocation8 + $0x198] sm:$0xff]
    %v151 = vld [vmem:[#allocation8 + $0x1a0] sm:$0xff]
    %v152 = vld [vmem:[#allocation8 + $0x1a8] sm:$0xff]
    %v153 = vld [vmem:[#allocation8 + $0x1b0] sm:$0xff]
    %v154 = vld [vmem:[#allocation8 + $0x1b8] sm:$0xff]
    %v155 = vld [vmem:[#allocation8 + $0x1c0] sm:$0xff]
    %v156 = vld [vmem:[#allocation8 + $0x1c8] sm:$0xff]
    %v157 = vld [vmem:[#allocation8 + $0x1d0] sm:$0xff]
    %v158 = vld [vmem:[#allocation8 + $0x1d8] sm:$0xff]
    %v159 = vld [vmem:[#allocation8 + $0x1e0] sm:$0xff]
    %v160 = vld [vmem:[#allocation8 + $0x1e8] sm:$0xff]
    %v161 = vld [vmem:[#allocation8 + $0x1f0] sm:$0xff]
    %v162 = vld [vmem:[#allocation8 + $0x1f8] sm:$0xff]
    %v163 = vld [vmem:[%s3] sm:$0xf]
    %v165 = vlaneseq
    %v166 = vshrl.u32 %v165, 7
    %v167 = vsub.s32 0, %v166
    %v168 = vrot.slane %v163, %v167
    %v169 = vlaneseq
    %v170 = vshrl.u32 %v169, 7
    %v171 = vsub.s32 1, %v170
    %v172 = vrot.slane %v163, %v171
    %v173 = vlaneseq
    %v174 = vshrl.u32 %v173, 7
    %v175 = vsub.s32 2, %v174
    %v176 = vrot.slane %v163, %v175
    %v177 = vlaneseq
    %v178 = vshrl.u32 %v177, 7
    %v179 = vsub.s32 3, %v178
    %v180 = vrot.slane %v163, %v179
    %185 = vmatprep.subr.mxu0 %v100
    %186 = vmatpush1.msra.mxu0 %v99
    %187 = vmatprep.subr.mxu0 %v104
    %188 = vmatpush1.msra.mxu0 %v103
    %189 = vmatprep.subr.mxu0 %v108
    %190 = vmatpush1.msra.mxu0 %v107
    %191 = vmatprep.subr.mxu0 %v112
    %192 = vmatpush1.msra.mxu0 %v111
    %193 = vmatprep.subr.mxu0 %v116
    %194 = vmatpush1.msra.mxu0 %v115
    %195 = vmatprep.subr.mxu0 %v120
    %196 = vmatpush1.msra.mxu0 %v119
    %197 = vmatprep.subr.mxu0 %v124
    %198 = vmatpush1.msra.mxu0 %v123
    %199 = vmatprep.subr.mxu0 %v128
    %200 = vmatpush1.msra.mxu0 %v127
    %201 = vmatprep.subr.mxu0 %v132
    %202 = vmatpush1.msra.mxu0 %v131
    %203 = vmatprep.subr.mxu0 %v136
    %204 = vmatpush1.msra.mxu0 %v135
    %205 = vmatprep.subr.mxu0 %v140
    %206 = vmatpush1.msra.mxu0 %v139
    %207 = vmatprep.subr.mxu0 %v144
    %208 = vmatpush1.msra.mxu0 %v143
    %209 = vmatprep.subr.mxu0 %v148
    %210 = vmatpush1.msra.mxu0 %v147
    %211 = vmatprep.subr.mxu0 %v152
    %212 = vmatpush1.msra.mxu0 %v151
    %213 = vmatprep.subr.mxu0 %v156
    %214 = vmatpush1.msra.mxu0 %v155
    %215 = vmatprep.subr.mxu0 %v160
    %216 = vmatpush1.msra.mxu0 %v159
    %217 = vmatprep.subr.mxu0 0.0
    %218 = vmatpush1.msra.mxu0 0.0
    %219 = vmatprep.subr.mxu0 0.0
    %220 = vmatpush1.msra.mxu0 0.0
    %221 = vmatprep.subr.mxu0 0.0
    %222 = vmatpush1.msra.mxu0 0.0
    %223 = vmatprep.subr.mxu0 0.0
    %224 = vmatpush1.msra.mxu0 0.0
    %225 = vmatprep.subr.mxu0 0.0
    %226 = vmatpush1.msra.mxu0 0.0
    %227 = vmatprep.subr.mxu0 0.0
    %228 = vmatpush1.msra.mxu0 0.0
    %229 = vmatprep.subr.mxu0 0.0
    %230 = vmatpush1.msra.mxu0 0.0
    %231 = vmatprep.subr.mxu0 0.0
    %232 = vmatpush1.msra.mxu0 0.0
    %233 = vmatprep.subr.mxu0 0.0
    %234 = vmatpush1.msra.mxu0 0.0
    %235 = vmatprep.subr.mxu0 0.0
    %236 = vmatpush1.msra.mxu0 0.0
    %237 = vmatprep.subr.mxu0 0.0
    %238 = vmatpush1.msra.mxu0 0.0
    %239 = vmatprep.subr.mxu0 0.0
    %240 = vmatpush1.msra.mxu0 0.0
    %241 = vmatprep.subr.mxu0 0.0
    %242 = vmatpush1.msra.mxu0 0.0
    %243 = vmatprep.subr.mxu0 0.0
    %244 = vmatpush1.msra.mxu0 0.0
    %245 = vmatprep.subr.mxu0 0.0
    %246 = vmatpush1.msra.mxu0 0.0
    %247 = vmatprep.subr.mxu0 0.0
    %248 = vmatpush1.msra.mxu0 0.0
    %249 = vmatprep.mubr.f32.mxu0 0.0
    %250 = vmatmul.mubr.f32.gmra.mrb[0].mxu0 %v91
    %v251 = vpop.f32.mrb[0].mxu0
    %v252 = vadd.f32 %v168, %v251
    %v253 = vpop.f32.mrb[0].mxu0
    %v254 = vadd.f32 %v172, %v253
    %255 = vmatprep.mubr.f32.mxu0 0.0
    %256 = vmatmul.mubr.f32.gmra.mrb[0].mxu0 %v92
    %v257 = vpop.f32.mrb[0].mxu0
    %v258 = vadd.f32 %v168, %v257
    %v259 = vpop.f32.mrb[0].mxu0
    %v260 = vadd.f32 %v172, %v259
    %261 = vmatprep.mubr.f32.mxu0 0.0
    %262 = vmatmul.mubr.f32.gmra.mrb[0].mxu0 %v93
    %v263 = vpop.f32.mrb[0].mxu0
    %v264 = vadd.f32 %v168, %v263
    %v265 = vpop.f32.mrb[0].mxu0
    %v266 = vadd.f32 %v172, %v265
    %267 = vmatprep.mubr.f32.mxu0 0.0
    %268 = vmatmul.mubr.f32.gmra.mrb[0].mxu0 %v94
    %v269 = vpop.f32.mrb[0].mxu0
    %v270 = vadd.f32 %v168, %v269
    %v271 = vpop.f32.mrb[0].mxu0
    %v272 = vadd.f32 %v172, %v271
    %273 = vmatprep.mubr.f32.mxu0 0.0
    %274 = vmatmul.mubr.f32.gmra.mrb[0].mxu0 %v95
    %v275 = vpop.f32.mrb[0].mxu0
    %v276 = vadd.f32 %v168, %v275
    %v277 = vpop.f32.mrb[0].mxu0
    %v278 = vadd.f32 %v172, %v277
    %279 = vmatprep.mubr.f32.mxu0 0.0
    %280 = vmatmul.mubr.f32.gmra.mrb[0].mxu0 %v96
    %v281 = vpop.f32.mrb[0].mxu0
    %v282 = vadd.f32 %v168, %v281
    %v283 = vpop.f32.mrb[0].mxu0
    %v284 = vadd.f32 %v172, %v283
    %285 = vmatprep.mubr.f32.mxu0 0.0
    %286 = vmatmul.mubr.f32.gmra.mrb[0].mxu0 %v97
    %v287 = vpop.f32.mrb[0].mxu0
    %v288 = vadd.f32 %v168, %v287
    %v289 = vpop.f32.mrb[0].mxu0
    %v290 = vadd.f32 %v172, %v289
    %291 = vmatprep.mubr.f32.mxu0 0.0
    %292 = vmatmul.mubr.f32.gmra.mrb[0].mxu0 %v98
    %v293 = vpop.f32.mrb[0].mxu0
    %v294 = vadd.f32 %v168, %v293
    %v295 = vpop.f32.mrb[0].mxu0
    %v296 = vadd.f32 %v172, %v295
    %297 = vdwg.mxu0
    %298 = vmatprep.subr.mxu0 %v102
    %299 = vmatpush1.msra.mxu0 %v101
    %300 = vmatprep.subr.mxu0 %v106
    %301 = vmatpush1.msra.mxu0 %v105
    %302 = vmatprep.subr.mxu0 %v110
    %303 = vmatpush1.msra.mxu0 %v109
    %304 = vmatprep.subr.mxu0 %v114
    %305 = vmatpush1.msra.mxu0 %v113
    %306 = vmatprep.subr.mxu0 %v118
    %307 = vmatpush1.msra.mxu0 %v117
    %308 = vmatprep.subr.mxu0 %v122
    %309 = vmatpush1.msra.mxu0 %v121
    %310 = vmatprep.subr.mxu0 %v126
    %311 = vmatpush1.msra.mxu0 %v125
    %312 = vmatprep.subr.mxu0 %v130
    %313 = vmatpush1.msra.mxu0 %v129
    %314 = vmatprep.subr.mxu0 %v134
    %315 = vmatpush1.msra.mxu0 %v133
    %316 = vmatprep.subr.mxu0 %v138
    %317 = vmatpush1.msra.mxu0 %v137
    %318 = vmatprep.subr.mxu0 %v142
    %319 = vmatpush1.msra.mxu0 %v141
    %320 = vmatprep.subr.mxu0 %v146
    %321 = vmatpush1.msra.mxu0 %v145
    %322 = vmatprep.subr.mxu0 %v150
    %323 = vmatpush1.msra.mxu0 %v149
    %324 = vmatprep.subr.mxu0 %v154
    %325 = vmatpush1.msra.mxu0 %v153
    %326 = vmatprep.subr.mxu0 %v158
    %327 = vmatpush1.msra.mxu0 %v157
    %328 = vmatprep.subr.mxu0 %v162
    %329 = vmatpush1.msra.mxu0 %v161
    %330 = vmatprep.subr.mxu0 0.0
    %331 = vmatpush1.msra.mxu0 0.0
    %332 = vmatprep.subr.mxu0 0.0
    %333 = vmatpush1.msra.mxu0 0.0
    %334 = vmatprep.subr.mxu0 0.0
    %335 = vmatpush1.msra.mxu0 0.0
    %336 = vmatprep.subr.mxu0 0.0
    %337 = vmatpush1.msra.mxu0 0.0
    %338 = vmatprep.subr.mxu0 0.0
    %339 = vmatpush1.msra.mxu0 0.0
    %340 = vmatprep.subr.mxu0 0.0
    %341 = vmatpush1.msra.mxu0 0.0
    %342 = vmatprep.subr.mxu0 0.0
    %343 = vmatpush1.msra.mxu0 0.0
    %344 = vmatprep.subr.mxu0 0.0
    %345 = vmatpush1.msra.mxu0 0.0
    %346 = vmatprep.subr.mxu0 0.0
    %347 = vmatpush1.msra.mxu0 0.0
    %348 = vmatprep.subr.mxu0 0.0
    %349 = vmatpush1.msra.mxu0 0.0
    %350 = vmatprep.subr.mxu0 0.0
    %351 = vmatpush1.msra.mxu0 0.0
    %352 = vmatprep.subr.mxu0 0.0
    %353 = vmatpush1.msra.mxu0 0.0
    %354 = vmatprep.subr.mxu0 0.0
    %355 = vmatpush1.msra.mxu0 0.0
    %356 = vmatprep.subr.mxu0 0.0
    %357 = vmatpush1.msra.mxu0 0.0
    %358 = vmatprep.subr.mxu0 0.0
    %359 = vmatpush1.msra.mxu0 0.0
    %360 = vmatprep.subr.mxu0 0.0
    %361 = vmatpush1.msra.mxu0 0.0
    %362 = vmatprep.mubr.f32.mxu0 0.0
    %363 = vmatmul.mubr.f32.gmra.mrb[0].mxu0 %v91
    %v364 = vpop.f32.mrb[0].mxu0
    %v365 = vadd.f32 %v176, %v364
    %v366 = vpop.f32.mrb[0].mxu0
    %v367 = vadd.f32 %v180, %v366
    %368 = vmatprep.mubr.f32.mxu0 0.0
    %369 = vmatmul.mubr.f32.gmra.mrb[0].mxu0 %v92
    %v370 = vpop.f32.mrb[0].mxu0
    %v371 = vadd.f32 %v176, %v370
    %v372 = vpop.f32.mrb[0].mxu0
    %v373 = vadd.f32 %v180, %v372
    %374 = vmatprep.mubr.f32.mxu0 0.0
    %375 = vmatmul.mubr.f32.gmra.mrb[0].mxu0 %v93
    %v376 = vpop.f32.mrb[0].mxu0
    %v377 = vadd.f32 %v176, %v376
    %v378 = vpop.f32.mrb[0].mxu0
    %v379 = vadd.f32 %v180, %v378
    %380 = vmatprep.mubr.f32.mxu0 0.0
    %381 = vmatmul.mubr.f32.gmra.mrb[0].mxu0 %v94
    %v382 = vpop.f32.mrb[0].mxu0
    %v383 = vadd.f32 %v176, %v382
    %v384 = vpop.f32.mrb[0].mxu0
    %v385 = vadd.f32 %v180, %v384
    %386 = vmatprep.mubr.f32.mxu0 0.0
    %387 = vmatmul.mubr.f32.gmra.mrb[0].mxu0 %v95
    %v388 = vpop.f32.mrb[0].mxu0
    %v389 = vadd.f32 %v176, %v388
    %v390 = vpop.f32.mrb[0].mxu0
    %v391 = vadd.f32 %v180, %v390
    %392 = vmatprep.mubr.f32.mxu0 0.0
    %393 = vmatmul.mubr.f32.gmra.mrb[0].mxu0 %v96
    %v394 = vpop.f32.mrb[0].mxu0
    %v395 = vadd.f32 %v176, %v394
    %v396 = vpop.f32.mrb[0].mxu0
    %v397 = vadd.f32 %v180, %v396
    %398 = vmatprep.mubr.f32.mxu0 0.0
    %399 = vmatmul.mubr.f32.gmra.mrb[0].mxu0 %v97
    %v400 = vpop.f32.mrb[0].mxu0
    %v401 = vadd.f32 %v176, %v400
    %v402 = vpop.f32.mrb[0].mxu0
    %v403 = vadd.f32 %v180, %v402
    %404 = vmatprep.mubr.f32.mxu0 0.0
    %405 = vmatmul.mubr.f32.gmra.mrb[0].mxu0 %v98
    %v406 = vpop.f32.mrb[0].mxu0
    %v407 = vadd.f32 %v176, %v406
    %v408 = vpop.f32.mrb[0].mxu0
    %v409 = vadd.f32 %v180, %v408
    %410 = vdwg.mxu0
    %411 = vst [vmem:[#allocation4] sm:$0xff] %v252
    %412 = vst [vmem:[#allocation4 + $0x8] sm:$0xff] %v254
    %413 = vst [vmem:[#allocation4 + $0x10] sm:$0xff] %v365
    %414 = vst [vmem:[#allocation4 + $0x18] sm:$0xff] %v367
    %415 = vst [vmem:[#allocation4 + $0x20] sm:$0xff] %v258
    %416 = vst [vmem:[#allocation4 + $0x28] sm:$0xff] %v260
    %417 = vst [vmem:[#allocation4 + $0x30] sm:$0xff] %v371
    %418 = vst [vmem:[#allocation4 + $0x38] sm:$0xff] %v373
    %419 = vst [vmem:[#allocation4 + $0x40] sm:$0xff] %v264
    %420 = vst [vmem:[#allocation4 + $0x48] sm:$0xff] %v266
    %421 = vst [vmem:[#allocation4 + $0x50] sm:$0xff] %v377
    %422 = vst [vmem:[#allocation4 + $0x58] sm:$0xff] %v379
    %423 = vst [vmem:[#allocation4 + $0x60] sm:$0xff] %v270
    %424 = vst [vmem:[#allocation4 + $0x68] sm:$0xff] %v272
    %425 = vst [vmem:[#allocation4 + $0x70] sm:$0xff] %v383
    %426 = vst [vmem:[#allocation4 + $0x78] sm:$0xff] %v385
    %427 = vst [vmem:[#allocation4 + $0x80] sm:$0xff] %v276
    %428 = vst [vmem:[#allocation4 + $0x88] sm:$0xff] %v278
    %429 = vst [vmem:[#allocation4 + $0x90] sm:$0xff] %v389
    %430 = vst [vmem:[#allocation4 + $0x98] sm:$0xff] %v391
    %431 = vst [vmem:[#allocation4 + $0xa0] sm:$0xff] %v282
    %432 = vst [vmem:[#allocation4 + $0xa8] sm:$0xff] %v284
    %433 = vst [vmem:[#allocation4 + $0xb0] sm:$0xff] %v395
    %434 = vst [vmem:[#allocation4 + $0xb8] sm:$0xff] %v397
    %435 = vst [vmem:[#allocation4 + $0xc0] sm:$0xff] %v288
    %436 = vst [vmem:[#allocation4 + $0xc8] sm:$0xff] %v290
    %437 = vst [vmem:[#allocation4 + $0xd0] sm:$0xff] %v401
    %438 = vst [vmem:[#allocation4 + $0xd8] sm:$0xff] %v403
    %439 = vst [vmem:[#allocation4 + $0xe0] sm:$0xff] %v294
    %440 = vst [vmem:[#allocation4 + $0xe8] sm:$0xff] %v296
    %441 = vst [vmem:[#allocation4 + $0xf0] sm:$0xff] %v407
    %442 = vst [vmem:[#allocation4 + $0xf8] sm:$0xff] %v409
    %v443 = vld [vmem:[#allocation10] sm:$0xff]
    %v444 = vld [vmem:[#allocation10 + $0x8] sm:$0xff]
    %v445 = vld [vmem:[#allocation10 + $0x10] sm:$0xff]
    %v446 = vld [vmem:[#allocation10 + $0x18] sm:$0xff]
    %v447 = vld [vmem:[#allocation10 + $0x20] sm:$0xff]
    %v448 = vld [vmem:[#allocation10 + $0x28] sm:$0xff]
    %v449 = vld [vmem:[#allocation10 + $0x30] sm:$0xff]
    %v450 = vld [vmem:[#allocation10 + $0x38] sm:$0xff]
    %v451 = vld [vmem:[#allocation10 + $0x40] sm:$0xff]
    %v452 = vld [vmem:[#allocation10 + $0x48] sm:$0xff]
    %v453 = vld [vmem:[#allocation10 + $0x50] sm:$0xff]
    %v454 = vld [vmem:[#allocation10 + $0x58] sm:$0xff]
    %v455 = vld [vmem:[#allocation10 + $0x60] sm:$0xff]
    %v456 = vld [vmem:[#allocation10 + $0x68] sm:$0xff]
    %v457 = vld [vmem:[#allocation10 + $0x70] sm:$0xff]
    %v458 = vld [vmem:[#allocation10 + $0x78] sm:$0xff]
    %v459 = vld [vmem:[#allocation10 + $0x80] sm:$0xff]
    %v460 = vld [vmem:[#allocation10 + $0x88] sm:$0xff]
    %v461 = vld [vmem:[#allocation10 + $0x90] sm:$0xff]
    %v462 = vld [vmem:[#allocation10 + $0x98] sm:$0xff]
    %v463 = vld [vmem:[#allocation10 + $0xa0] sm:$0xff]
    %v464 = vld [vmem:[#allocation10 + $0xa8] sm:$0xff]
    %v465 = vld [vmem:[#allocation10 + $0xb0] sm:$0xff]
    %v466 = vld [vmem:[#allocation10 + $0xb8] sm:$0xff]
    %v467 = vld [vmem:[#allocation10 + $0xc0] sm:$0xff]
    %v468 = vld [vmem:[#allocation10 + $0xc8] sm:$0xff]
    %v469 = vld [vmem:[#allocation10 + $0xd0] sm:$0xff]
    %v470 = vld [vmem:[#allocation10 + $0xd8] sm:$0xff]
    %v471 = vld [vmem:[#allocation10 + $0xe0] sm:$0xff]
    %v472 = vld [vmem:[#allocation10 + $0xe8] sm:$0xff]
    %v473 = vld [vmem:[#allocation10 + $0xf0] sm:$0xff]
    %v474 = vld [vmem:[#allocation10 + $0xf8] sm:$0xff]
    %v475 = vld [vmem:[#allocation10 + $0x100] sm:$0xff]
    %v476 = vld [vmem:[#allocation10 + $0x108] sm:$0xff]
    %v477 = vld [vmem:[#allocation10 + $0x110] sm:$0xff]
    %v478 = vld [vmem:[#allocation10 + $0x118] sm:$0xff]
    %v479 = vld [vmem:[#allocation10 + $0x120] sm:$0xff]
    %v480 = vld [vmem:[#allocation10 + $0x128] sm:$0xff]
    %v481 = vld [vmem:[#allocation10 + $0x130] sm:$0xff]
    %v482 = vld [vmem:[#allocation10 + $0x138] sm:$0xff]
    %v483 = vld [vmem:[#allocation10 + $0x140] sm:$0xff]
    %v484 = vld [vmem:[#allocation10 + $0x148] sm:$0xff]
    %v485 = vld [vmem:[#allocation10 + $0x150] sm:$0xff]
    %v486 = vld [vmem:[#allocation10 + $0x158] sm:$0xff]
    %v487 = vld [vmem:[#allocation10 + $0x160] sm:$0xff]
    %v488 = vld [vmem:[#allocation10 + $0x168] sm:$0xff]
    %v489 = vld [vmem:[#allocation10 + $0x170] sm:$0xff]
    %v490 = vld [vmem:[#allocation10 + $0x178] sm:$0xff]
    %v491 = vld [vmem:[#allocation10 + $0x180] sm:$0xff]
    %v492 = vld [vmem:[#allocation10 + $0x188] sm:$0xff]
    %v493 = vld [vmem:[#allocation10 + $0x190] sm:$0xff]
    %v494 = vld [vmem:[#allocation10 + $0x198] sm:$0xff]
    %v495 = vld [vmem:[#allocation10 + $0x1a0] sm:$0xff]
    %v496 = vld [vmem:[#allocation10 + $0x1a8] sm:$0xff]
    %v497 = vld [vmem:[#allocation10 + $0x1b0] sm:$0xff]
    %v498 = vld [vmem:[#allocation10 + $0x1b8] sm:$0xff]
    %v499 = vld [vmem:[#allocation10 + $0x1c0] sm:$0xff]
    %v500 = vld [vmem:[#allocation10 + $0x1c8] sm:$0xff]
    %v501 = vld [vmem:[#allocation10 + $0x1d0] sm:$0xff]
    %v502 = vld [vmem:[#allocation10 + $0x1d8] sm:$0xff]
    %v503 = vld [vmem:[#allocation10 + $0x1e0] sm:$0xff]
    %v504 = vld [vmem:[#allocation10 + $0x1e8] sm:$0xff]
    %v505 = vld [vmem:[#allocation10 + $0x1f0] sm:$0xff]
    %v506 = vld [vmem:[#allocation10 + $0x1f8] sm:$0xff]
    %s507 = smul.u32 0, 8
    %v508 = vld [vmem:[#allocation2] sm:$0xff]
    %v509 = vld [vmem:[#allocation3] sm:$0xff]
    %s510 = smul.u32 0, 4
    %s511 = smul.addr %s510, 8
    %s512 = scalar_lea.vmem [#allocation4], %s511
    %v513 = vld [vmem:[%s512] sm:$0xff]
    %v514 = vld [vmem:[%s512 + $0x8] sm:$0xff]
    %v515 = vld [vmem:[%s512 + $0x10] sm:$0xff]
    %v516 = vld [vmem:[%s512 + $0x18] sm:$0xff]
    %517 = vmatprep.subr.mxu0 %v444
    %518 = vmatpush1.msra.mxu0 %v443
    %519 = vmatprep.subr.mxu0 %v448
    %520 = vmatpush1.msra.mxu0 %v447
    %521 = vmatprep.subr.mxu0 %v452
    %522 = vmatpush1.msra.mxu0 %v451
    %523 = vmatprep.subr.mxu0 %v456
    %524 = vmatpush1.msra.mxu0 %v455
    %525 = vmatprep.subr.mxu0 %v460
    %526 = vmatpush1.msra.mxu0 %v459
    %527 = vmatprep.subr.mxu0 %v464
    %528 = vmatpush1.msra.mxu0 %v463
    %529 = vmatprep.subr.mxu0 %v468
    %530 = vmatpush1.msra.mxu0 %v467
    %531 = vmatprep.subr.mxu0 %v472
    %532 = vmatpush1.msra.mxu0 %v471
    %533 = vmatprep.subr.mxu0 %v476
    %534 = vmatpush1.msra.mxu0 %v475
    %535 = vmatprep.subr.mxu0 %v480
    %536 = vmatpush1.msra.mxu0 %v479
    %537 = vmatprep.subr.mxu0 %v484
    %538 = vmatpush1.msra.mxu0 %v483
    %539 = vmatprep.subr.mxu0 %v488
    %540 = vmatpush1.msra.mxu0 %v487
    %541 = vmatprep.subr.mxu0 %v492
    %542 = vmatpush1.msra.mxu0 %v491
    %543 = vmatprep.subr.mxu0 %v496
    %544 = vmatpush1.msra.mxu0 %v495
    %545 = vmatprep.subr.mxu0 %v500
    %546 = vmatpush1.msra.mxu0 %v499
    %547 = vmatprep.subr.mxu0 %v504
    %548 = vmatpush1.msra.mxu0 %v503
    %549 = vmatprep.subr.mxu0 0.0
    %550 = vmatpush1.msra.mxu0 0.0
    %551 = vmatprep.subr.mxu0 0.0
    %552 = vmatpush1.msra.mxu0 0.0
    %553 = vmatprep.subr.mxu0 0.0
    %554 = vmatpush1.msra.mxu0 0.0
    %555 = vmatprep.subr.mxu0 0.0
    %556 = vmatpush1.msra.mxu0 0.0
    %557 = vmatprep.subr.mxu0 0.0
    %558 = vmatpush1.msra.mxu0 0.0
    %559 = vmatprep.subr.mxu0 0.0
    %560 = vmatpush1.msra.mxu0 0.0
    %561 = vmatprep.subr.mxu0 0.0
    %562 = vmatpush1.msra.mxu0 0.0
    %563 = vmatprep.subr.mxu0 0.0
    %564 = vmatpush1.msra.mxu0 0.0
    %565 = vmatprep.subr.mxu0 0.0
    %566 = vmatpush1.msra.mxu0 0.0
    %567 = vmatprep.subr.mxu0 0.0
    %568 = vmatpush1.msra.mxu0 0.0
    %569 = vmatprep.subr.mxu0 0.0
    %570 = vmatpush1.msra.mxu0 0.0
    %571 = vmatprep.subr.mxu0 0.0
    %572 = vmatpush1.msra.mxu0 0.0
    %573 = vmatprep.subr.mxu0 0.0
    %574 = vmatpush1.msra.mxu0 0.0
    %575 = vmatprep.subr.mxu0 0.0
    %576 = vmatpush1.msra.mxu0 0.0
    %577 = vmatprep.subr.mxu0 0.0
    %578 = vmatpush1.msra.mxu0 0.0
    %579 = vmatprep.subr.mxu0 0.0
    %580 = vmatpush1.msra.mxu0 0.0
    %581 = vmatprep.mubr.f32.mxu0 0.0
    %582 = vmatmul.mubr.f32.gmra.mrb[0].mxu0 %v508
    %v583 = vpop.f32.mrb[0].mxu0
    %v584 = vadd.f32 0.0, %v583
    %v585 = vpop.f32.mrb[0].mxu0
    %v586 = vadd.f32 0.0, %v585
    %587 = vdwg.mxu0
    %588 = vmatprep.subr.mxu0 %v446
    %589 = vmatpush1.msra.mxu0 %v445
    %590 = vmatprep.subr.mxu0 %v450
    %591 = vmatpush1.msra.mxu0 %v449
    %592 = vmatprep.subr.mxu0 %v454
    %593 = vmatpush1.msra.mxu0 %v453
    %594 = vmatprep.subr.mxu0 %v458
    %595 = vmatpush1.msra.mxu0 %v457
    %596 = vmatprep.subr.mxu0 %v462
    %597 = vmatpush1.msra.mxu0 %v461
    %598 = vmatprep.subr.mxu0 %v466
    %599 = vmatpush1.msra.mxu0 %v465
    %600 = vmatprep.subr.mxu0 %v470
    %601 = vmatpush1.msra.mxu0 %v469
    %602 = vmatprep.subr.mxu0 %v474
    %603 = vmatpush1.msra.mxu0 %v473
    %604 = vmatprep.subr.mxu0 %v478
    %605 = vmatpush1.msra.mxu0 %v477
    %606 = vmatprep.subr.mxu0 %v482
    %607 = vmatpush1.msra.mxu0 %v481
    %608 = vmatprep.subr.mxu0 %v486
    %609 = vmatpush1.msra.mxu0 %v485
    %610 = vmatprep.subr.mxu0 %v490
    %611 = vmatpush1.msra.mxu0 %v489
    %612 = vmatprep.subr.mxu0 %v494
    %613 = vmatpush1.msra.mxu0 %v493
    %614 = vmatprep.subr.mxu0 %v498
    %615 = vmatpush1.msra.mxu0 %v497
    %616 = vmatprep.subr.mxu0 %v502
    %617 = vmatpush1.msra.mxu0 %v501
    %618 = vmatprep.subr.mxu0 %v506
    %619 = vmatpush1.msra.mxu0 %v505
    %620 = vmatprep.subr.mxu0 0.0
    %621 = vmatpush1.msra.mxu0 0.0
    %622 = vmatprep.subr.mxu0 0.0
    %623 = vmatpush1.msra.mxu0 0.0
    %624 = vmatprep.subr.mxu0 0.0
    %625 = vmatpush1.msra.mxu0 0.0
    %626 = vmatprep.subr.mxu0 0.0
    %627 = vmatpush1.msra.mxu0 0.0
    %628 = vmatprep.subr.mxu0 0.0
    %629 = vmatpush1.msra.mxu0 0.0
    %630 = vmatprep.subr.mxu0 0.0
    %631 = vmatpush1.msra.mxu0 0.0
    %632 = vmatprep.subr.mxu0 0.0
    %633 = vmatpush1.msra.mxu0 0.0
    %634 = vmatprep.subr.mxu0 0.0
    %635 = vmatpush1.msra.mxu0 0.0
    %636 = vmatprep.subr.mxu0 0.0
    %637 = vmatpush1.msra.mxu0 0.0
    %638 = vmatprep.subr.mxu0 0.0
    %639 = vmatpush1.msra.mxu0 0.0
    %640 = vmatprep.subr.mxu0 0.0
    %641 = vmatpush1.msra.mxu0 0.0
    %642 = vmatprep.subr.mxu0 0.0
    %643 = vmatpush1.msra.mxu0 0.0
    %644 = vmatprep.subr.mxu0 0.0
    %645 = vmatpush1.msra.mxu0 0.0
    %646 = vmatprep.subr.mxu0 0.0
    %647 = vmatpush1.msra.mxu0 0.0
    %648 = vmatprep.subr.mxu0 0.0
    %649 = vmatpush1.msra.mxu0 0.0
    %650 = vmatprep.subr.mxu0 0.0
    %651 = vmatpush1.msra.mxu0 0.0
    %652 = vmatprep.mubr.f32.mxu0 0.0
    %653 = vmatmul.mubr.f32.gmra.mrb[0].mxu0 %v508
    %v654 = vpop.f32.mrb[0].mxu0
    %v655 = vadd.f32 0.0, %v654
    %v656 = vpop.f32.mrb[0].mxu0
    %v657 = vadd.f32 0.0, %v656
    %658 = vdwg.mxu0
    %v659 = vadd.f32 %v513, %v584
    %v660 = vadd.f32 %v514, %v586
    %v661 = vadd.f32 %v515, %v655
    %v662 = vadd.f32 %v516, %v657
    %vm663 = vcmp.ge.f32.partialorder %v659, 0.0
    %vm664 = vcmp.ge.f32.partialorder %v660, 0.0
    %vm665 = vcmp.ge.f32.partialorder %v661, 0.0
    %vm666 = vcmp.ge.f32.partialorder %v662, 0.0
    %v667 = vsel %vm663, 1, 0
    %v668 = vsel %vm664, 1, 0
    %v669 = vsel %vm665, 1, 0
    %v670 = vsel %vm666, 1, 0
    %v671 = vcvt.s32.f32 %v667
    %v672 = vcvt.s32.f32 %v668
    %v673 = vcvt.s32.f32 %v669
    %v674 = vcvt.s32.f32 %v670
    %v675 = vmul.f32 %v509, %v672
    %v676 = vmul.f32 %v671, %v673
    %v677 = vadd.f32 %v675, %v676
    %v678 = vmul.f32 %v677, %v674
    %p679 = scmp.lt.s32.totalorder %s507, 8
    %s680 = scalar_select %p679, 1, 0
    %v681 = vstv %s680
    %vm682 = vcmp.eq.s32.totalorder %v681, 1
    %v683 = vsel %vm682, %v678, %v508
    %v684 = vsel %vm682, %v677, %v509
    %s685 = smul.u32 1, 4
    %s686 = smul.addr %s685, 8
    %s687 = scalar_lea.vmem [#allocation4], %s686
    %v688 = vld [vmem:[%s687] sm:$0xff]
    %v689 = vld [vmem:[%s687 + $0x8] sm:$0xff]
    %v690 = vld [vmem:[%s687 + $0x10] sm:$0xff]
    %v691 = vld [vmem:[%s687 + $0x18] sm:$0xff]
    %692 = vmatprep.subr.mxu0 %v444
    %693 = vmatpush1.msra.mxu0 %v443
    %694 = vmatprep.subr.mxu0 %v448
    %695 = vmatpush1.msra.mxu0 %v447
    %696 = vmatprep.subr.mxu0 %v452
    %697 = vmatpush1.msra.mxu0 %v451
    %698 = vmatprep.subr.mxu0 %v456
    %699 = vmatpush1.msra.mxu0 %v455
    %700 = vmatprep.subr.mxu0 %v460
    %701 = vmatpush1.msra.mxu0 %v459
    %702 = vmatprep.subr.mxu0 %v464
    %703 = vmatpush1.msra.mxu0 %v463
    %704 = vmatprep.subr.mxu0 %v468
    %705 = vmatpush1.msra.mxu0 %v467
    %706 = vmatprep.subr.mxu0 %v472
    %707 = vmatpush1.msra.mxu0 %v471
    %708 = vmatprep.subr.mxu0 %v476
    %709 = vmatpush1.msra.mxu0 %v475
    %710 = vmatprep.subr.mxu0 %v480
    %711 = vmatpush1.msra.mxu0 %v479
    %712 = vmatprep.subr.mxu0 %v484
    %713 = vmatpush1.msra.mxu0 %v483
    %714 = vmatprep.subr.mxu0 %v488
    %715 = vmatpush1.msra.mxu0 %v487
    %716 = vmatprep.subr.mxu0 %v492
    %717 = vmatpush1.msra.mxu0 %v491
    %718 = vmatprep.subr.mxu0 %v496
    %719 = vmatpush1.msra.mxu0 %v495
    %720 = vmatprep.subr.mxu0 %v500
    %721 = vmatpush1.msra.mxu0 %v499
    %722 = vmatprep.subr.mxu0 %v504
    %723 = vmatpush1.msra.mxu0 %v503
    %724 = vmatprep.subr.mxu0 0.0
    %725 = vmatpush1.msra.mxu0 0.0
    %726 = vmatprep.subr.mxu0 0.0
    %727 = vmatpush1.msra.mxu0 0.0
    %728 = vmatprep.subr.mxu0 0.0
    %729 = vmatpush1.msra.mxu0 0.0
    %730 = vmatprep.subr.mxu0 0.0
    %731 = vmatpush1.msra.mxu0 0.0
    %732 = vmatprep.subr.mxu0 0.0
    %733 = vmatpush1.msra.mxu0 0.0
    %734 = vmatprep.subr.mxu0 0.0
    %735 = vmatpush1.msra.mxu0 0.0
    %736 = vmatprep.subr.mxu0 0.0
    %737 = vmatpush1.msra.mxu0 0.0
    %738 = vmatprep.subr.mxu0 0.0
    %739 = vmatpush1.msra.mxu0 0.0
    %740 = vmatprep.subr.mxu0 0.0
    %741 = vmatpush1.msra.mxu0 0.0
    %742 = vmatprep.subr.mxu0 0.0
    %743 = vmatpush1.msra.mxu0 0.0
    %744 = vmatprep.subr.mxu0 0.0
    %745 = vmatpush1.msra.mxu0 0.0
    %746 = vmatprep.subr.mxu0 0.0
    %747 = vmatpush1.msra.mxu0 0.0
    %748 = vmatprep.subr.mxu0 0.0
    %749 = vmatpush1.msra.mxu0 0.0
    %750 = vmatprep.subr.mxu0 0.0
    %751 = vmatpush1.msra.mxu0 0.0
    %752 = vmatprep.subr.mxu0 0.0
    %753 = vmatpush1.msra.mxu0 0.0
    %754 = vmatprep.subr.mxu0 0.0
    %755 = vmatpush1.msra.mxu0 0.0
    %756 = vmatprep.mubr.f32.mxu0 0.0
    %757 = vmatmul.mubr.f32.gmra.mrb[0].mxu0 %v683
    %v758 = vpop.f32.mrb[0].mxu0
    %v759 = vadd.f32 0.0, %v758
    %v760 = vpop.f32.mrb[0].mxu0
    %v761 = vadd.f32 0.0, %v760
    %762 = vdwg.mxu0
    %763 = vmatprep.subr.mxu0 %v446
    %764 = vmatpush1.msra.mxu0 %v445
    %765 = vmatprep.subr.mxu0 %v450
    %766 = vmatpush1.msra.mxu0 %v449
    %767 = vmatprep.subr.mxu0 %v454
    %768 = vmatpush1.msra.mxu0 %v453
    %769 = vmatprep.subr.mxu0 %v458
    %770 = vmatpush1.msra.mxu0 %v457
    %771 = vmatprep.subr.mxu0 %v462
    %772 = vmatpush1.msra.mxu0 %v461
    %773 = vmatprep.subr.mxu0 %v466
    %774 = vmatpush1.msra.mxu0 %v465
    %775 = vmatprep.subr.mxu0 %v470
    %776 = vmatpush1.msra.mxu0 %v469
    %777 = vmatprep.subr.mxu0 %v474
    %778 = vmatpush1.msra.mxu0 %v473
    %779 = vmatprep.subr.mxu0 %v478
    %780 = vmatpush1.msra.mxu0 %v477
    %781 = vmatprep.subr.mxu0 %v482
    %782 = vmatpush1.msra.mxu0 %v481
    %783 = vmatprep.subr.mxu0 %v486
    %784 = vmatpush1.msra.mxu0 %v485
    %785 = vmatprep.subr.mxu0 %v490
    %786 = vmatpush1.msra.mxu0 %v489
    %787 = vmatprep.subr.mxu0 %v494
    %788 = vmatpush1.msra.mxu0 %v493
    %789 = vmatprep.subr.mxu0 %v498
    %790 = vmatpush1.msra.mxu0 %v497
    %791 = vmatprep.subr.mxu0 %v502
    %792 = vmatpush1.msra.mxu0 %v501
    %793 = vmatprep.subr.mxu0 %v506
    %794 = vmatpush1.msra.mxu0 %v505
    %795 = vmatprep.subr.mxu0 0.0
    %796 = vmatpush1.msra.mxu0 0.0
    %797 = vmatprep.subr.mxu0 0.0
    %798 = vmatpush1.msra.mxu0 0.0
    %799 = vmatprep.subr.mxu0 0.0
    %800 = vmatpush1.msra.mxu0 0.0
    %801 = vmatprep.subr.mxu0 0.0
    %802 = vmatpush1.msra.mxu0 0.0
    %803 = vmatprep.subr.mxu0 0.0
    %804 = vmatpush1.msra.mxu0 0.0
    %805 = vmatprep.subr.mxu0 0.0
    %806 = vmatpush1.msra.mxu0 0.0
    %807 = vmatprep.subr.mxu0 0.0
    %808 = vmatpush1.msra.mxu0 0.0
    %809 = vmatprep.subr.mxu0 0.0
    %810 = vmatpush1.msra.mxu0 0.0
    %811 = vmatprep.subr.mxu0 0.0
    %812 = vmatpush1.msra.mxu0 0.0
    %813 = vmatprep.subr.mxu0 0.0
    %814 = vmatpush1.msra.mxu0 0.0
    %815 = vmatprep.subr.mxu0 0.0
    %816 = vmatpush1.msra.mxu0 0.0
    %817 = vmatprep.subr.mxu0 0.0
    %818 = vmatpush1.msra.mxu0 0.0
    %819 = vmatprep.subr.mxu0 0.0
    %820 = vmatpush1.msra.mxu0 0.0
    %821 = vmatprep.subr.mxu0 0.0
    %822 = vmatpush1.msra.mxu0 0.0
    %823 = vmatprep.subr.mxu0 0.0
    %824 = vmatpush1.msra.mxu0 0.0
    %825 = vmatprep.subr.mxu0 0.0
    %826 = vmatpush1.msra.mxu0 0.0
    %827 = vmatprep.mubr.f32.mxu0 0.0
    %828 = vmatmul.mubr.f32.gmra.mrb[0].mxu0 %v683
    %v829 = vpop.f32.mrb[0].mxu0
    %v830 = vadd.f32 0.0, %v829
    %v831 = vpop.f32.mrb[0].mxu0
    %v832 = vadd.f32 0.0, %v831
    %833 = vdwg.mxu0
    %v834 = vadd.f32 %v688, %v759
    %v835 = vadd.f32 %v689, %v761
    %v836 = vadd.f32 %v690, %v830
    %v837 = vadd.f32 %v691, %v832
    %vm838 = vcmp.ge.f32.partialorder %v834, 0.0
    %vm839 = vcmp.ge.f32.partialorder %v835, 0.0
    %vm840 = vcmp.ge.f32.partialorder %v836, 0.0
    %vm841 = vcmp.ge.f32.partialorder %v837, 0.0
    %v842 = vsel %vm838, 1, 0
    %v843 = vsel %vm839, 1, 0
    %v844 = vsel %vm840, 1, 0
    %v845 = vsel %vm841, 1, 0
    %v846 = vcvt.s32.f32 %v842
    %v847 = vcvt.s32.f32 %v843
    %v848 = vcvt.s32.f32 %v844
    %v849 = vcvt.s32.f32 %v845
    %v850 = vmul.f32 %v684, %v847
    %v851 = vmul.f32 %v846, %v848
    %v852 = vadd.f32 %v850, %v851
    %v853 = vmul.f32 %v852, %v849
    %s854 = sadd.s32 %s507, 1
    %p855 = scmp.lt.s32.totalorder %s854, 8
    %s856 = scalar_select %p855, 1, 0
    %v857 = vstv %s856
    %vm858 = vcmp.eq.s32.totalorder %v857, 1
    %v859 = vsel %vm858, %v853, %v683
    %v860 = vsel %vm858, %v852, %v684
    %s861 = smul.u32 2, 4
    %s862 = smul.addr %s861, 8
    %s863 = scalar_lea.vmem [#allocation4], %s862
    %v864 = vld [vmem:[%s863] sm:$0xff]
    %v865 = vld [vmem:[%s863 + $0x8] sm:$0xff]
    %v866 = vld [vmem:[%s863 + $0x10] sm:$0xff]
    %v867 = vld [vmem:[%s863 + $0x18] sm:$0xff]
    %868 = vmatprep.subr.mxu0 %v444
    %869 = vmatpush1.msra.mxu0 %v443
    %870 = vmatprep.subr.mxu0 %v448
    %871 = vmatpush1.msra.mxu0 %v447
    %872 = vmatprep.subr.mxu0 %v452
    %873 = vmatpush1.msra.mxu0 %v451
    %874 = vmatprep.subr.mxu0 %v456
    %875 = vmatpush1.msra.mxu0 %v455
    %876 = vmatprep.subr.mxu0 %v460
    %877 = vmatpush1.msra.mxu0 %v459
    %878 = vmatprep.subr.mxu0 %v464
    %879 = vmatpush1.msra.mxu0 %v463
    %880 = vmatprep.subr.mxu0 %v468
    %881 = vmatpush1.msra.mxu0 %v467
    %882 = vmatprep.subr.mxu0 %v472
    %883 = vmatpush1.msra.mxu0 %v471
    %884 = vmatprep.subr.mxu0 %v476
    %885 = vmatpush1.msra.mxu0 %v475
    %886 = vmatprep.subr.mxu0 %v480
    %887 = vmatpush1.msra.mxu0 %v479
    %888 = vmatprep.subr.mxu0 %v484
    %889 = vmatpush1.msra.mxu0 %v483
    %890 = vmatprep.subr.mxu0 %v488
    %891 = vmatpush1.msra.mxu0 %v487
    %892 = vmatprep.subr.mxu0 %v492
    %893 = vmatpush1.msra.mxu0 %v491
    %894 = vmatprep.subr.mxu0 %v496
    %895 = vmatpush1.msra.mxu0 %v495
    %896 = vmatprep.subr.mxu0 %v500
    %897 = vmatpush1.msra.mxu0 %v499
    %898 = vmatprep.subr.mxu0 %v504
    %899 = vmatpush1.msra.mxu0 %v503
    %900 = vmatprep.subr.mxu0 0.0
    %901 = vmatpush1.msra.mxu0 0.0
    %902 = vmatprep.subr.mxu0 0.0
    %903 = vmatpush1.msra.mxu0 0.0
    %904 = vmatprep.subr.mxu0 0.0
    %905 = vmatpush1.msra.mxu0 0.0
    %906 = vmatprep.subr.mxu0 0.0
    %907 = vmatpush1.msra.mxu0 0.0
    %908 = vmatprep.subr.mxu0 0.0
    %909 = vmatpush1.msra.mxu0 0.0
    %910 = vmatprep.subr.mxu0 0.0
    %911 = vmatpush1.msra.mxu0 0.0
    %912 = vmatprep.subr.mxu0 0.0
    %913 = vmatpush1.msra.mxu0 0.0
    %914 = vmatprep.subr.mxu0 0.0
    %915 = vmatpush1.msra.mxu0 0.0
    %916 = vmatprep.subr.mxu0 0.0
    %917 = vmatpush1.msra.mxu0 0.0
    %918 = vmatprep.subr.mxu0 0.0
    %919 = vmatpush1.msra.mxu0 0.0
    %920 = vmatprep.subr.mxu0 0.0
    %921 = vmatpush1.msra.mxu0 0.0
    %922 = vmatprep.subr.mxu0 0.0
    %923 = vmatpush1.msra.mxu0 0.0
    %924 = vmatprep.subr.mxu0 0.0
    %925 = vmatpush1.msra.mxu0 0.0
    %926 = vmatprep.subr.mxu0 0.0
    %927 = vmatpush1.msra.mxu0 0.0
    %928 = vmatprep.subr.mxu0 0.0
    %929 = vmatpush1.msra.mxu0 0.0
    %930 = vmatprep.subr.mxu0 0.0
    %931 = vmatpush1.msra.mxu0 0.0
    %932 = vmatprep.mubr.f32.mxu0 0.0
    %933 = vmatmul.mubr.f32.gmra.mrb[0].mxu0 %v859
    %v934 = vpop.f32.mrb[0].mxu0
    %v935 = vadd.f32 0.0, %v934
    %v936 = vpop.f32.mrb[0].mxu0
    %v937 = vadd.f32 0.0, %v936
    %938 = vdwg.mxu0
    %939 = vmatprep.subr.mxu0 %v446
    %940 = vmatpush1.msra.mxu0 %v445
    %941 = vmatprep.subr.mxu0 %v450
    %942 = vmatpush1.msra.mxu0 %v449
    %943 = vmatprep.subr.mxu0 %v454
    %944 = vmatpush1.msra.mxu0 %v453
    %945 = vmatprep.subr.mxu0 %v458
    %946 = vmatpush1.msra.mxu0 %v457
    %947 = vmatprep.subr.mxu0 %v462
    %948 = vmatpush1.msra.mxu0 %v461
    %949 = vmatprep.subr.mxu0 %v466
    %950 = vmatpush1.msra.mxu0 %v465
    %951 = vmatprep.subr.mxu0 %v470
    %952 = vmatpush1.msra.mxu0 %v469
    %953 = vmatprep.subr.mxu0 %v474
    %954 = vmatpush1.msra.mxu0 %v473
    %955 = vmatprep.subr.mxu0 %v478
    %956 = vmatpush1.msra.mxu0 %v477
    %957 = vmatprep.subr.mxu0 %v482
    %958 = vmatpush1.msra.mxu0 %v481
    %959 = vmatprep.subr.mxu0 %v486
    %960 = vmatpush1.msra.mxu0 %v485
    %961 = vmatprep.subr.mxu0 %v490
    %962 = vmatpush1.msra.mxu0 %v489
    %963 = vmatprep.subr.mxu0 %v494
    %964 = vmatpush1.msra.mxu0 %v493
    %965 = vmatprep.subr.mxu0 %v498
    %966 = vmatpush1.msra.mxu0 %v497
    %967 = vmatprep.subr.mxu0 %v502
    %968 = vmatpush1.msra.mxu0 %v501
    %969 = vmatprep.subr.mxu0 %v506
    %970 = vmatpush1.msra.mxu0 %v505
    %971 = vmatprep.subr.mxu0 0.0
    %972 = vmatpush1.msra.mxu0 0.0
    %973 = vmatprep.subr.mxu0 0.0
    %974 = vmatpush1.msra.mxu0 0.0
    %975 = vmatprep.subr.mxu0 0.0
    %976 = vmatpush1.msra.mxu0 0.0
    %977 = vmatprep.subr.mxu0 0.0
    %978 = vmatpush1.msra.mxu0 0.0
    %979 = vmatprep.subr.mxu0 0.0
    %980 = vmatpush1.msra.mxu0 0.0
    %981 = vmatprep.subr.mxu0 0.0
    %982 = vmatpush1.msra.mxu0 0.0
    %983 = vmatprep.subr.mxu0 0.0
    %984 = vmatpush1.msra.mxu0 0.0
    %985 = vmatprep.subr.mxu0 0.0
    %986 = vmatpush1.msra.mxu0 0.0
    %987 = vmatprep.subr.mxu0 0.0
    %988 = vmatpush1.msra.mxu0 0.0
    %989 = vmatprep.subr.mxu0 0.0
    %990 = vmatpush1.msra.mxu0 0.0
    %991 = vmatprep.subr.mxu0 0.0
    %992 = vmatpush1.msra.mxu0 0.0
    %993 = vmatprep.subr.mxu0 0.0
    %994 = vmatpush1.msra.mxu0 0.0
    %995 = vmatprep.subr.mxu0 0.0
    %996 = vmatpush1.msra.mxu0 0.0
    %997 = vmatprep.subr.mxu0 0.0
    %998 = vmatpush1.msra.mxu0 0.0
    %999 = vmatprep.subr.mxu0 0.0
    %1000 = vmatpush1.msra.mxu0 0.0
    %1001 = vmatprep.subr.mxu0 0.0
    %1002 = vmatpush1.msra.mxu0 0.0
    %1003 = vmatprep.mubr.f32.mxu0 0.0
    %1004 = vmatmul.mubr.f32.gmra.mrb[0].mxu0 %v859
    %v1005 = vpop.f32.mrb[0].mxu0
    %v1006 = vadd.f32 0.0, %v1005
    %v1007 = vpop.f32.mrb[0].mxu0
    %v1008 = vadd.f32 0.0, %v1007
    %1009 = vdwg.mxu0
    %v1010 = vadd.f32 %v864, %v935
    %v1011 = vadd.f32 %v865, %v937
    %v1012 = vadd.f32 %v866, %v1006
    %v1013 = vadd.f32 %v867, %v1008
    %vm1014 = vcmp.ge.f32.partialorder %v1010, 0.0
    %vm1015 = vcmp.ge.f32.partialorder %v1011, 0.0
    %vm1016 = vcmp.ge.f32.partialorder %v1012, 0.0
    %vm1017 = vcmp.ge.f32.partialorder %v1013, 0.0
    %v1018 = vsel %vm1014, 1, 0
    %v1019 = vsel %vm1015, 1, 0
    %v1020 = vsel %vm1016, 1, 0
    %v1021 = vsel %vm1017, 1, 0
    %v1022 = vcvt.s32.f32 %v1018
    %v1023 = vcvt.s32.f32 %v1019
    %v1024 = vcvt.s32.f32 %v1020
    %v1025 = vcvt.s32.f32 %v1021
    %v1026 = vmul.f32 %v860, %v1023
    %v1027 = vmul.f32 %v1022, %v1024
    %v1028 = vadd.f32 %v1026, %v1027
    %v1029 = vmul.f32 %v1028, %v1025
    %s1030 = sadd.s32 %s507, 2
    %p1031 = scmp.lt.s32.totalorder %s1030, 8
    %s1032 = scalar_select %p1031, 1, 0
    %v1033 = vstv %s1032
    %vm1034 = vcmp.eq.s32.totalorder %v1033, 1
    %v1035 = vsel %vm1034, %v1029, %v859
    %v1036 = vsel %vm1034, %v1028, %v860
    %s1037 = smul.u32 3, 4
    %s1038 = smul.addr %s1037, 8
    %s1039 = scalar_lea.vmem [#allocation4], %s1038
    %v1040 = vld [vmem:[%s1039] sm:$0xff]
    %v1041 = vld [vmem:[%s1039 + $0x8] sm:$0xff]
    %v1042 = vld [vmem:[%s1039 + $0x10] sm:$0xff]
    %v1043 = vld [vmem:[%s1039 + $0x18] sm:$0xff]
    %1044 = vmatprep.subr.mxu0 %v444
    %1045 = vmatpush1.msra.mxu0 %v443
    %1046 = vmatprep.subr.mxu0 %v448
    %1047 = vmatpush1.msra.mxu0 %v447
    %1048 = vmatprep.subr.mxu0 %v452
    %1049 = vmatpush1.msra.mxu0 %v451
    %1050 = vmatprep.subr.mxu0 %v456
    %1051 = vmatpush1.msra.mxu0 %v455
    %1052 = vmatprep.subr.mxu0 %v460
    %1053 = vmatpush1.msra.mxu0 %v459
    %1054 = vmatprep.subr.mxu0 %v464
    %1055 = vmatpush1.msra.mxu0 %v463
    %1056 = vmatprep.subr.mxu0 %v468
    %1057 = vmatpush1.msra.mxu0 %v467
    %1058 = vmatprep.subr.mxu0 %v472
    %1059 = vmatpush1.msra.mxu0 %v471
    %1060 = vmatprep.subr.mxu0 %v476
    %1061 = vmatpush1.msra.mxu0 %v475
    %1062 = vmatprep.subr.mxu0 %v480
    %1063 = vmatpush1.msra.mxu0 %v479
    %1064 = vmatprep.subr.mxu0 %v484
    %1065 = vmatpush1.msra.mxu0 %v483
    %1066 = vmatprep.subr.mxu0 %v488
    %1067 = vmatpush1.msra.mxu0 %v487
    %1068 = vmatprep.subr.mxu0 %v492
    %1069 = vmatpush1.msra.mxu0 %v491
    %1070 = vmatprep.subr.mxu0 %v496
    %1071 = vmatpush1.msra.mxu0 %v495
    %1072 = vmatprep.subr.mxu0 %v500
    %1073 = vmatpush1.msra.mxu0 %v499
    %1074 = vmatprep.subr.mxu0 %v504
    %1075 = vmatpush1.msra.mxu0 %v503
    %1076 = vmatprep.subr.mxu0 0.0
    %1077 = vmatpush1.msra.mxu0 0.0
    %1078 = vmatprep.subr.mxu0 0.0
    %1079 = vmatpush1.msra.mxu0 0.0
    %1080 = vmatprep.subr.mxu0 0.0
    %1081 = vmatpush1.msra.mxu0 0.0
    %1082 = vmatprep.subr.mxu0 0.0
    %1083 = vmatpush1.msra.mxu0 0.0
    %1084 = vmatprep.subr.mxu0 0.0
    %1085 = vmatpush1.msra.mxu0 0.0
    %1086 = vmatprep.subr.mxu0 0.0
    %1087 = vmatpush1.msra.mxu0 0.0
    %1088 = vmatprep.subr.mxu0 0.0
    %1089 = vmatpush1.msra.mxu0 0.0
    %1090 = vmatprep.subr.mxu0 0.0
    %1091 = vmatpush1.msra.mxu0 0.0
    %1092 = vmatprep.subr.mxu0 0.0
    %1093 = vmatpush1.msra.mxu0 0.0
    %1094 = vmatprep.subr.mxu0 0.0
    %1095 = vmatpush1.msra.mxu0 0.0
    %1096 = vmatprep.subr.mxu0 0.0
    %1097 = vmatpush1.msra.mxu0 0.0
    %1098 = vmatprep.subr.mxu0 0.0
    %1099 = vmatpush1.msra.mxu0 0.0
    %1100 = vmatprep.subr.mxu0 0.0
    %1101 = vmatpush1.msra.mxu0 0.0
    %1102 = vmatprep.subr.mxu0 0.0
    %1103 = vmatpush1.msra.mxu0 0.0
    %1104 = vmatprep.subr.mxu0 0.0
    %1105 = vmatpush1.msra.mxu0 0.0
    %1106 = vmatprep.subr.mxu0 0.0
    %1107 = vmatpush1.msra.mxu0 0.0
    %1108 = vmatprep.mubr.f32.mxu0 0.0
    %1109 = vmatmul.mubr.f32.gmra.mrb[0].mxu0 %v1035
    %v1110 = vpop.f32.mrb[0].mxu0
    %v1111 = vadd.f32 0.0, %v1110
    %v1112 = vpop.f32.mrb[0].mxu0
    %v1113 = vadd.f32 0.0, %v1112
    %1114 = vdwg.mxu0
    %1115 = vmatprep.subr.mxu0 %v446
    %1116 = vmatpush1.msra.mxu0 %v445
    %1117 = vmatprep.subr.mxu0 %v450
    %1118 = vmatpush1.msra.mxu0 %v449
    %1119 = vmatprep.subr.mxu0 %v454
    %1120 = vmatpush1.msra.mxu0 %v453
    %1121 = vmatprep.subr.mxu0 %v458
    %1122 = vmatpush1.msra.mxu0 %v457
    %1123 = vmatprep.subr.mxu0 %v462
    %1124 = vmatpush1.msra.mxu0 %v461
    %1125 = vmatprep.subr.mxu0 %v466
    %1126 = vmatpush1.msra.mxu0 %v465
    %1127 = vmatprep.subr.mxu0 %v470
    %1128 = vmatpush1.msra.mxu0 %v469
    %1129 = vmatprep.subr.mxu0 %v474
    %1130 = vmatpush1.msra.mxu0 %v473
    %1131 = vmatprep.subr.mxu0 %v478
    %1132 = vmatpush1.msra.mxu0 %v477
    %1133 = vmatprep.subr.mxu0 %v482
    %1134 = vmatpush1.msra.mxu0 %v481
    %1135 = vmatprep.subr.mxu0 %v486
    %1136 = vmatpush1.msra.mxu0 %v485
    %1137 = vmatprep.subr.mxu0 %v490
    %1138 = vmatpush1.msra.mxu0 %v489
    %1139 = vmatprep.subr.mxu0 %v494
    %1140 = vmatpush1.msra.mxu0 %v493
    %1141 = vmatprep.subr.mxu0 %v498
    %1142 = vmatpush1.msra.mxu0 %v497
    %1143 = vmatprep.subr.mxu0 %v502
    %1144 = vmatpush1.msra.mxu0 %v501
    %1145 = vmatprep.subr.mxu0 %v506
    %1146 = vmatpush1.msra.mxu0 %v505
    %1147 = vmatprep.subr.mxu0 0.0
    %1148 = vmatpush1.msra.mxu0 0.0
    %1149 = vmatprep.subr.mxu0 0.0
    %1150 = vmatpush1.msra.mxu0 0.0
    %1151 = vmatprep.subr.mxu0 0.0
    %1152 = vmatpush1.msra.mxu0 0.0
    %1153 = vmatprep.subr.mxu0 0.0
    %1154 = vmatpush1.msra.mxu0 0.0
    %1155 = vmatprep.subr.mxu0 0.0
    %1156 = vmatpush1.msra.mxu0 0.0
    %1157 = vmatprep.subr.mxu0 0.0
    %1158 = vmatpush1.msra.mxu0 0.0
    %1159 = vmatprep.subr.mxu0 0.0
    %1160 = vmatpush1.msra.mxu0 0.0
    %1161 = vmatprep.subr.mxu0 0.0
    %1162 = vmatpush1.msra.mxu0 0.0
    %1163 = vmatprep.subr.mxu0 0.0
    %1164 = vmatpush1.msra.mxu0 0.0
    %1165 = vmatprep.subr.mxu0 0.0
    %1166 = vmatpush1.msra.mxu0 0.0
    %1167 = vmatprep.subr.mxu0 0.0
    %1168 = vmatpush1.msra.mxu0 0.0
    %1169 = vmatprep.subr.mxu0 0.0
    %1170 = vmatpush1.msra.mxu0 0.0
    %1171 = vmatprep.subr.mxu0 0.0
    %1172 = vmatpush1.msra.mxu0 0.0
    %1173 = vmatprep.subr.mxu0 0.0
    %1174 = vmatpush1.msra.mxu0 0.0
    %1175 = vmatprep.subr.mxu0 0.0
    %1176 = vmatpush1.msra.mxu0 0.0
    %1177 = vmatprep.subr.mxu0 0.0
    %1178 = vmatpush1.msra.mxu0 0.0
    %1179 = vmatprep.mubr.f32.mxu0 0.0
    %1180 = vmatmul.mubr.f32.gmra.mrb[0].mxu0 %v1035
    %v1181 = vpop.f32.mrb[0].mxu0
    %v1182 = vadd.f32 0.0, %v1181
    %v1183 = vpop.f32.mrb[0].mxu0
    %v1184 = vadd.f32 0.0, %v1183
    %1185 = vdwg.mxu0
    %v1186 = vadd.f32 %v1040, %v1111
    %v1187 = vadd.f32 %v1041, %v1113
    %v1188 = vadd.f32 %v1042, %v1182
    %v1189 = vadd.f32 %v1043, %v1184
    %vm1190 = vcmp.ge.f32.partialorder %v1186, 0.0
    %vm1191 = vcmp.ge.f32.partialorder %v1187, 0.0
    %vm1192 = vcmp.ge.f32.partialorder %v1188, 0.0
    %vm1193 = vcmp.ge.f32.partialorder %v1189, 0.0
    %v1194 = vsel %vm1190, 1, 0
    %v1195 = vsel %vm1191, 1, 0
    %v1196 = vsel %vm1192, 1, 0
    %v1197 = vsel %vm1193, 1, 0
    %v1198 = vcvt.s32.f32 %v1194
    %v1199 = vcvt.s32.f32 %v1195
    %v1200 = vcvt.s32.f32 %v1196
    %v1201 = vcvt.s32.f32 %v1197
    %v1202 = vmul.f32 %v1036, %v1199
    %v1203 = vmul.f32 %v1198, %v1200
    %v1204 = vadd.f32 %v1202, %v1203
    %v1205 = vmul.f32 %v1204, %v1201
    %s1206 = sadd.s32 %s507, 3
    %p1207 = scmp.lt.s32.totalorder %s1206, 8
    %s1208 = scalar_select %p1207, 1, 0
    %v1209 = vstv %s1208
    %vm1210 = vcmp.eq.s32.totalorder %v1209, 1
    %v1211 = vsel %vm1210, %v1205, %v1035
    %v1212 = vsel %vm1210, %v1204, %v1036
    %s1213 = smul.u32 4, 4
    %s1214 = smul.addr %s1213, 8
    %s1215 = scalar_lea.vmem [#allocation4], %s1214
    %v1216 = vld [vmem:[%s1215] sm:$0xff]
    %v1217 = vld [vmem:[%s1215 + $0x8] sm:$0xff]
    %v1218 = vld [vmem:[%s1215 + $0x10] sm:$0xff]
    %v1219 = vld [vmem:[%s1215 + $0x18] sm:$0xff]
    %1220 = vmatprep.subr.mxu0 %v444
    %1221 = vmatpush1.msra.mxu0 %v443
    %1222 = vmatprep.subr.mxu0 %v448
    %1223 = vmatpush1.msra.mxu0 %v447
    %1224 = vmatprep.subr.mxu0 %v452
    %1225 = vmatpush1.msra.mxu0 %v451
    %1226 = vmatprep.subr.mxu0 %v456
    %1227 = vmatpush1.msra.mxu0 %v455
    %1228 = vmatprep.subr.mxu0 %v460
    %1229 = vmatpush1.msra.mxu0 %v459
    %1230 = vmatprep.subr.mxu0 %v464
    %1231 = vmatpush1.msra.mxu0 %v463
    %1232 = vmatprep.subr.mxu0 %v468
    %1233 = vmatpush1.msra.mxu0 %v467
    %1234 = vmatprep.subr.mxu0 %v472
    %1235 = vmatpush1.msra.mxu0 %v471
    %1236 = vmatprep.subr.mxu0 %v476
    %1237 = vmatpush1.msra.mxu0 %v475
    %1238 = vmatprep.subr.mxu0 %v480
    %1239 = vmatpush1.msra.mxu0 %v479
    %1240 = vmatprep.subr.mxu0 %v484
    %1241 = vmatpush1.msra.mxu0 %v483
    %1242 = vmatprep.subr.mxu0 %v488
    %1243 = vmatpush1.msra.mxu0 %v487
    %1244 = vmatprep.subr.mxu0 %v492
    %1245 = vmatpush1.msra.mxu0 %v491
    %1246 = vmatprep.subr.mxu0 %v496
    %1247 = vmatpush1.msra.mxu0 %v495
    %1248 = vmatprep.subr.mxu0 %v500
    %1249 = vmatpush1.msra.mxu0 %v499
    %1250 = vmatprep.subr.mxu0 %v504
    %1251 = vmatpush1.msra.mxu0 %v503
    %1252 = vmatprep.subr.mxu0 0.0
    %1253 = vmatpush1.msra.mxu0 0.0
    %1254 = vmatprep.subr.mxu0 0.0
    %1255 = vmatpush1.msra.mxu0 0.0
    %1256 = vmatprep.subr.mxu0 0.0
    %1257 = vmatpush1.msra.mxu0 0.0
    %1258 = vmatprep.subr.mxu0 0.0
    %1259 = vmatpush1.msra.mxu0 0.0
    %1260 = vmatprep.subr.mxu0 0.0
    %1261 = vmatpush1.msra.mxu0 0.0
    %1262 = vmatprep.subr.mxu0 0.0
    %1263 = vmatpush1.msra.mxu0 0.0
    %1264 = vmatprep.subr.mxu0 0.0
    %1265 = vmatpush1.msra.mxu0 0.0
    %1266 = vmatprep.subr.mxu0 0.0
    %1267 = vmatpush1.msra.mxu0 0.0
    %1268 = vmatprep.subr.mxu0 0.0
    %1269 = vmatpush1.msra.mxu0 0.0
    %1270 = vmatprep.subr.mxu0 0.0
    %1271 = vmatpush1.msra.mxu0 0.0
    %1272 = vmatprep.subr.mxu0 0.0
    %1273 = vmatpush1.msra.mxu0 0.0
    %1274 = vmatprep.subr.mxu0 0.0
    %1275 = vmatpush1.msra.mxu0 0.0
    %1276 = vmatprep.subr.mxu0 0.0
    %1277 = vmatpush1.msra.mxu0 0.0
    %1278 = vmatprep.subr.mxu0 0.0
    %1279 = vmatpush1.msra.mxu0 0.0
    %1280 = vmatprep.subr.mxu0 0.0
    %1281 = vmatpush1.msra.mxu0 0.0
    %1282 = vmatprep.subr.mxu0 0.0
    %1283 = vmatpush1.msra.mxu0 0.0
    %1284 = vmatprep.mubr.f32.mxu0 0.0
    %1285 = vmatmul.mubr.f32.gmra.mrb[0].mxu0 %v1211
    %v1286 = vpop.f32.mrb[0].mxu0
    %v1287 = vadd.f32 0.0, %v1286
    %v1288 = vpop.f32.mrb[0].mxu0
    %v1289 = vadd.f32 0.0, %v1288
    %1290 = vdwg.mxu0
    %1291 = vmatprep.subr.mxu0 %v446
    %1292 = vmatpush1.msra.mxu0 %v445
    %1293 = vmatprep.subr.mxu0 %v450
    %1294 = vmatpush1.msra.mxu0 %v449
    %1295 = vmatprep.subr.mxu0 %v454
    %1296 = vmatpush1.msra.mxu0 %v453
    %1297 = vmatprep.subr.mxu0 %v458
    %1298 = vmatpush1.msra.mxu0 %v457
    %1299 = vmatprep.subr.mxu0 %v462
    %1300 = vmatpush1.msra.mxu0 %v461
    %1301 = vmatprep.subr.mxu0 %v466
    %1302 = vmatpush1.msra.mxu0 %v465
    %1303 = vmatprep.subr.mxu0 %v470
    %1304 = vmatpush1.msra.mxu0 %v469
    %1305 = vmatprep.subr.mxu0 %v474
    %1306 = vmatpush1.msra.mxu0 %v473
    %1307 = vmatprep.subr.mxu0 %v478
    %1308 = vmatpush1.msra.mxu0 %v477
    %1309 = vmatprep.subr.mxu0 %v482
    %1310 = vmatpush1.msra.mxu0 %v481
    %1311 = vmatprep.subr.mxu0 %v486
    %1312 = vmatpush1.msra.mxu0 %v485
    %1313 = vmatprep.subr.mxu0 %v490
    %1314 = vmatpush1.msra.mxu0 %v489
    %1315 = vmatprep.subr.mxu0 %v494
    %1316 = vmatpush1.msra.mxu0 %v493
    %1317 = vmatprep.subr.mxu0 %v498
    %1318 = vmatpush1.msra.mxu0 %v497
    %1319 = vmatprep.subr.mxu0 %v502
    %1320 = vmatpush1.msra.mxu0 %v501
    %1321 = vmatprep.subr.mxu0 %v506
    %1322 = vmatpush1.msra.mxu0 %v505
    %1323 = vmatprep.subr.mxu0 0.0
    %1324 = vmatpush1.msra.mxu0 0.0
    %1325 = vmatprep.subr.mxu0 0.0
    %1326 = vmatpush1.msra.mxu0 0.0
    %1327 = vmatprep.subr.mxu0 0.0
    %1328 = vmatpush1.msra.mxu0 0.0
    %1329 = vmatprep.subr.mxu0 0.0
    %1330 = vmatpush1.msra.mxu0 0.0
    %1331 = vmatprep.subr.mxu0 0.0
    %1332 = vmatpush1.msra.mxu0 0.0
    %1333 = vmatprep.subr.mxu0 0.0
    %1334 = vmatpush1.msra.mxu0 0.0
    %1335 = vmatprep.subr.mxu0 0.0
    %1336 = vmatpush1.msra.mxu0 0.0
    %1337 = vmatprep.subr.mxu0 0.0
    %1338 = vmatpush1.msra.mxu0 0.0
    %1339 = vmatprep.subr.mxu0 0.0
    %1340 = vmatpush1.msra.mxu0 0.0
    %1341 = vmatprep.subr.mxu0 0.0
    %1342 = vmatpush1.msra.mxu0 0.0
    %1343 = vmatprep.subr.mxu0 0.0
    %1344 = vmatpush1.msra.mxu0 0.0
    %1345 = vmatprep.subr.mxu0 0.0
    %1346 = vmatpush1.msra.mxu0 0.0
    %1347 = vmatprep.subr.mxu0 0.0
    %1348 = vmatpush1.msra.mxu0 0.0
    %1349 = vmatprep.subr.mxu0 0.0
    %1350 = vmatpush1.msra.mxu0 0.0
    %1351 = vmatprep.subr.mxu0 0.0
    %1352 = vmatpush1.msra.mxu0 0.0
    %1353 = vmatprep.subr.mxu0 0.0
    %1354 = vmatpush1.msra.mxu0 0.0
    %1355 = vmatprep.mubr.f32.mxu0 0.0
    %1356 = vmatmul.mubr.f32.gmra.mrb[0].mxu0 %v1211
    %v1357 = vpop.f32.mrb[0].mxu0
    %v1358 = vadd.f32 0.0, %v1357
    %v1359 = vpop.f32.mrb[0].mxu0
    %v1360 = vadd.f32 0.0, %v1359
    %1361 = vdwg.mxu0
    %v1362 = vadd.f32 %v1216, %v1287
    %v1363 = vadd.f32 %v1217, %v1289
    %v1364 = vadd.f32 %v1218, %v1358
    %v1365 = vadd.f32 %v1219, %v1360
    %vm1366 = vcmp.ge.f32.partialorder %v1362, 0.0
    %vm1367 = vcmp.ge.f32.partialorder %v1363, 0.0
    %vm1368 = vcmp.ge.f32.partialorder %v1364, 0.0
    %vm1369 = vcmp.ge.f32.partialorder %v1365, 0.0
    %v1370 = vsel %vm1366, 1, 0
    %v1371 = vsel %vm1367, 1, 0
    %v1372 = vsel %vm1368, 1, 0
    %v1373 = vsel %vm1369, 1, 0
    %v1374 = vcvt.s32.f32 %v1370
    %v1375 = vcvt.s32.f32 %v1371
    %v1376 = vcvt.s32.f32 %v1372
    %v1377 = vcvt.s32.f32 %v1373
    %v1378 = vmul.f32 %v1212, %v1375
    %v1379 = vmul.f32 %v1374, %v1376
    %v1380 = vadd.f32 %v1378, %v1379
    %v1381 = vmul.f32 %v1380, %v1377
    %s1382 = sadd.s32 %s507, 4
    %p1383 = scmp.lt.s32.totalorder %s1382, 8
    %s1384 = scalar_select %p1383, 1, 0
    %v1385 = vstv %s1384
    %vm1386 = vcmp.eq.s32.totalorder %v1385, 1
    %v1387 = vsel %vm1386, %v1381, %v1211
    %v1388 = vsel %vm1386, %v1380, %v1212
    %s1389 = smul.u32 5, 4
    %s1390 = smul.addr %s1389, 8
    %s1391 = scalar_lea.vmem [#allocation4], %s1390
    %v1392 = vld [vmem:[%s1391] sm:$0xff]
    %v1393 = vld [vmem:[%s1391 + $0x8] sm:$0xff]
    %v1394 = vld [vmem:[%s1391 + $0x10] sm:$0xff]
    %v1395 = vld [vmem:[%s1391 + $0x18] sm:$0xff]
    %1396 = vmatprep.subr.mxu0 %v444
    %1397 = vmatpush1.msra.mxu0 %v443
    %1398 = vmatprep.subr.mxu0 %v448
    %1399 = vmatpush1.msra.mxu0 %v447
    %1400 = vmatprep.subr.mxu0 %v452
    %1401 = vmatpush1.msra.mxu0 %v451
    %1402 = vmatprep.subr.mxu0 %v456
    %1403 = vmatpush1.msra.mxu0 %v455
    %1404 = vmatprep.subr.mxu0 %v460
    %1405 = vmatpush1.msra.mxu0 %v459
    %1406 = vmatprep.subr.mxu0 %v464
    %1407 = vmatpush1.msra.mxu0 %v463
    %1408 = vmatprep.subr.mxu0 %v468
    %1409 = vmatpush1.msra.mxu0 %v467
    %1410 = vmatprep.subr.mxu0 %v472
    %1411 = vmatpush1.msra.mxu0 %v471
    %1412 = vmatprep.subr.mxu0 %v476
    %1413 = vmatpush1.msra.mxu0 %v475
    %1414 = vmatprep.subr.mxu0 %v480
    %1415 = vmatpush1.msra.mxu0 %v479
    %1416 = vmatprep.subr.mxu0 %v484
    %1417 = vmatpush1.msra.mxu0 %v483
    %1418 = vmatprep.subr.mxu0 %v488
    %1419 = vmatpush1.msra.mxu0 %v487
    %1420 = vmatprep.subr.mxu0 %v492
    %1421 = vmatpush1.msra.mxu0 %v491
    %1422 = vmatprep.subr.mxu0 %v496
    %1423 = vmatpush1.msra.mxu0 %v495
    %1424 = vmatprep.subr.mxu0 %v500
    %1425 = vmatpush1.msra.mxu0 %v499
    %1426 = vmatprep.subr.mxu0 %v504
    %1427 = vmatpush1.msra.mxu0 %v503
    %1428 = vmatprep.subr.mxu0 0.0
    %1429 = vmatpush1.msra.mxu0 0.0
    %1430 = vmatprep.subr.mxu0 0.0
    %1431 = vmatpush1.msra.mxu0 0.0
    %1432 = vmatprep.subr.mxu0 0.0
    %1433 = vmatpush1.msra.mxu0 0.0
    %1434 = vmatprep.subr.mxu0 0.0
    %1435 = vmatpush1.msra.mxu0 0.0
    %1436 = vmatprep.subr.mxu0 0.0
    %1437 = vmatpush1.msra.mxu0 0.0
    %1438 = vmatprep.subr.mxu0 0.0
    %1439 = vmatpush1.msra.mxu0 0.0
    %1440 = vmatprep.subr.mxu0 0.0
    %1441 = vmatpush1.msra.mxu0 0.0
    %1442 = vmatprep.subr.mxu0 0.0
    %1443 = vmatpush1.msra.mxu0 0.0
    %1444 = vmatprep.subr.mxu0 0.0
    %1445 = vmatpush1.msra.mxu0 0.0
    %1446 = vmatprep.subr.mxu0 0.0
    %1447 = vmatpush1.msra.mxu0 0.0
    %1448 = vmatprep.subr.mxu0 0.0
    %1449 = vmatpush1.msra.mxu0 0.0
    %1450 = vmatprep.subr.mxu0 0.0
    %1451 = vmatpush1.msra.mxu0 0.0
    %1452 = vmatprep.subr.mxu0 0.0
    %1453 = vmatpush1.msra.mxu0 0.0
    %1454 = vmatprep.subr.mxu0 0.0
    %1455 = vmatpush1.msra.mxu0 0.0
    %1456 = vmatprep.subr.mxu0 0.0
    %1457 = vmatpush1.msra.mxu0 0.0
    %1458 = vmatprep.subr.mxu0 0.0
    %1459 = vmatpush1.msra.mxu0 0.0
    %1460 = vmatprep.mubr.f32.mxu0 0.0
    %1461 = vmatmul.mubr.f32.gmra.mrb[0].mxu0 %v1387
    %v1462 = vpop.f32.mrb[0].mxu0
    %v1463 = vadd.f32 0.0, %v1462
    %v1464 = vpop.f32.mrb[0].mxu0
    %v1465 = vadd.f32 0.0, %v1464
    %1466 = vdwg.mxu0
    %1467 = vmatprep.subr.mxu0 %v446
    %1468 = vmatpush1.msra.mxu0 %v445
    %1469 = vmatprep.subr.mxu0 %v450
    %1470 = vmatpush1.msra.mxu0 %v449
    %1471 = vmatprep.subr.mxu0 %v454
    %1472 = vmatpush1.msra.mxu0 %v453
    %1473 = vmatprep.subr.mxu0 %v458
    %1474 = vmatpush1.msra.mxu0 %v457
    %1475 = vmatprep.subr.mxu0 %v462
    %1476 = vmatpush1.msra.mxu0 %v461
    %1477 = vmatprep.subr.mxu0 %v466
    %1478 = vmatpush1.msra.mxu0 %v465
    %1479 = vmatprep.subr.mxu0 %v470
    %1480 = vmatpush1.msra.mxu0 %v469
    %1481 = vmatprep.subr.mxu0 %v474
    %1482 = vmatpush1.msra.mxu0 %v473
    %1483 = vmatprep.subr.mxu0 %v478
    %1484 = vmatpush1.msra.mxu0 %v477
    %1485 = vmatprep.subr.mxu0 %v482
    %1486 = vmatpush1.msra.mxu0 %v481
    %1487 = vmatprep.subr.mxu0 %v486
    %1488 = vmatpush1.msra.mxu0 %v485
    %1489 = vmatprep.subr.mxu0 %v490
    %1490 = vmatpush1.msra.mxu0 %v489
    %1491 = vmatprep.subr.mxu0 %v494
    %1492 = vmatpush1.msra.mxu0 %v493
    %1493 = vmatprep.subr.mxu0 %v498
    %1494 = vmatpush1.msra.mxu0 %v497
    %1495 = vmatprep.subr.mxu0 %v502
    %1496 = vmatpush1.msra.mxu0 %v501
    %1497 = vmatprep.subr.mxu0 %v506
    %1498 = vmatpush1.msra.mxu0 %v505
    %1499 = vmatprep.subr.mxu0 0.0
    %1500 = vmatpush1.msra.mxu0 0.0
    %1501 = vmatprep.subr.mxu0 0.0
    %1502 = vmatpush1.msra.mxu0 0.0
    %1503 = vmatprep.subr.mxu0 0.0
    %1504 = vmatpush1.msra.mxu0 0.0
    %1505 = vmatprep.subr.mxu0 0.0
    %1506 = vmatpush1.msra.mxu0 0.0
    %1507 = vmatprep.subr.mxu0 0.0
    %1508 = vmatpush1.msra.mxu0 0.0
    %1509 = vmatprep.subr.mxu0 0.0
    %1510 = vmatpush1.msra.mxu0 0.0
    %1511 = vmatprep.subr.mxu0 0.0
    %1512 = vmatpush1.msra.mxu0 0.0
    %1513 = vmatprep.subr.mxu0 0.0
    %1514 = vmatpush1.msra.mxu0 0.0
    %1515 = vmatprep.subr.mxu0 0.0
    %1516 = vmatpush1.msra.mxu0 0.0
    %1517 = vmatprep.subr.mxu0 0.0
    %1518 = vmatpush1.msra.mxu0 0.0
    %1519 = vmatprep.subr.mxu0 0.0
    %1520 = vmatpush1.msra.mxu0 0.0
    %1521 = vmatprep.subr.mxu0 0.0
    %1522 = vmatpush1.msra.mxu0 0.0
    %1523 = vmatprep.subr.mxu0 0.0
    %1524 = vmatpush1.msra.mxu0 0.0
    %1525 = vmatprep.subr.mxu0 0.0
    %1526 = vmatpush1.msra.mxu0 0.0
    %1527 = vmatprep.subr.mxu0 0.0
    %1528 = vmatpush1.msra.mxu0 0.0
    %1529 = vmatprep.subr.mxu0 0.0
    %1530 = vmatpush1.msra.mxu0 0.0
    %1531 = vmatprep.mubr.f32.mxu0 0.0
    %1532 = vmatmul.mubr.f32.gmra.mrb[0].mxu0 %v1387
    %v1533 = vpop.f32.mrb[0].mxu0
    %v1534 = vadd.f32 0.0, %v1533
    %v1535 = vpop.f32.mrb[0].mxu0
    %v1536 = vadd.f32 0.0, %v1535
    %1537 = vdwg.mxu0
    %v1538 = vadd.f32 %v1392, %v1463
    %v1539 = vadd.f32 %v1393, %v1465
    %v1540 = vadd.f32 %v1394, %v1534
    %v1541 = vadd.f32 %v1395, %v1536
    %vm1542 = vcmp.ge.f32.partialorder %v1538, 0.0
    %vm1543 = vcmp.ge.f32.partialorder %v1539, 0.0
    %vm1544 = vcmp.ge.f32.partialorder %v1540, 0.0
    %vm1545 = vcmp.ge.f32.partialorder %v1541, 0.0
    %v1546 = vsel %vm1542, 1, 0
    %v1547 = vsel %vm1543, 1, 0
    %v1548 = vsel %vm1544, 1, 0
    %v1549 = vsel %vm1545, 1, 0
    %v1550 = vcvt.s32.f32 %v1546
    %v1551 = vcvt.s32.f32 %v1547
    %v1552 = vcvt.s32.f32 %v1548
    %v1553 = vcvt.s32.f32 %v1549
    %v1554 = vmul.f32 %v1388, %v1551
    %v1555 = vmul.f32 %v1550, %v1552
    %v1556 = vadd.f32 %v1554, %v1555
    %v1557 = vmul.f32 %v1556, %v1553
    %s1558 = sadd.s32 %s507, 5
    %p1559 = scmp.lt.s32.totalorder %s1558, 8
    %s1560 = scalar_select %p1559, 1, 0
    %v1561 = vstv %s1560
    %vm1562 = vcmp.eq.s32.totalorder %v1561, 1
    %v1563 = vsel %vm1562, %v1557, %v1387
    %v1564 = vsel %vm1562, %v1556, %v1388
    %s1565 = smul.u32 6, 4
    %s1566 = smul.addr %s1565, 8
    %s1567 = scalar_lea.vmem [#allocation4], %s1566
    %v1568 = vld [vmem:[%s1567] sm:$0xff]
    %v1569 = vld [vmem:[%s1567 + $0x8] sm:$0xff]
    %v1570 = vld [vmem:[%s1567 + $0x10] sm:$0xff]
    %v1571 = vld [vmem:[%s1567 + $0x18] sm:$0xff]
    %1572 = vmatprep.subr.mxu0 %v444
    %1573 = vmatpush1.msra.mxu0 %v443
    %1574 = vmatprep.subr.mxu0 %v448
    %1575 = vmatpush1.msra.mxu0 %v447
    %1576 = vmatprep.subr.mxu0 %v452
    %1577 = vmatpush1.msra.mxu0 %v451
    %1578 = vmatprep.subr.mxu0 %v456
    %1579 = vmatpush1.msra.mxu0 %v455
    %1580 = vmatprep.subr.mxu0 %v460
    %1581 = vmatpush1.msra.mxu0 %v459
    %1582 = vmatprep.subr.mxu0 %v464
    %1583 = vmatpush1.msra.mxu0 %v463
    %1584 = vmatprep.subr.mxu0 %v468
    %1585 = vmatpush1.msra.mxu0 %v467
    %1586 = vmatprep.subr.mxu0 %v472
    %1587 = vmatpush1.msra.mxu0 %v471
    %1588 = vmatprep.subr.mxu0 %v476
    %1589 = vmatpush1.msra.mxu0 %v475
    %1590 = vmatprep.subr.mxu0 %v480
    %1591 = vmatpush1.msra.mxu0 %v479
    %1592 = vmatprep.subr.mxu0 %v484
    %1593 = vmatpush1.msra.mxu0 %v483
    %1594 = vmatprep.subr.mxu0 %v488
    %1595 = vmatpush1.msra.mxu0 %v487
    %1596 = vmatprep.subr.mxu0 %v492
    %1597 = vmatpush1.msra.mxu0 %v491
    %1598 = vmatprep.subr.mxu0 %v496
    %1599 = vmatpush1.msra.mxu0 %v495
    %1600 = vmatprep.subr.mxu0 %v500
    %1601 = vmatpush1.msra.mxu0 %v499
    %1602 = vmatprep.subr.mxu0 %v504
    %1603 = vmatpush1.msra.mxu0 %v503
    %1604 = vmatprep.subr.mxu0 0.0
    %1605 = vmatpush1.msra.mxu0 0.0
    %1606 = vmatprep.subr.mxu0 0.0
    %1607 = vmatpush1.msra.mxu0 0.0
    %1608 = vmatprep.subr.mxu0 0.0
    %1609 = vmatpush1.msra.mxu0 0.0
    %1610 = vmatprep.subr.mxu0 0.0
    %1611 = vmatpush1.msra.mxu0 0.0
    %1612 = vmatprep.subr.mxu0 0.0
    %1613 = vmatpush1.msra.mxu0 0.0
    %1614 = vmatprep.subr.mxu0 0.0
    %1615 = vmatpush1.msra.mxu0 0.0
    %1616 = vmatprep.subr.mxu0 0.0
    %1617 = vmatpush1.msra.mxu0 0.0
    %1618 = vmatprep.subr.mxu0 0.0
    %1619 = vmatpush1.msra.mxu0 0.0
    %1620 = vmatprep.subr.mxu0 0.0
    %1621 = vmatpush1.msra.mxu0 0.0
    %1622 = vmatprep.subr.mxu0 0.0
    %1623 = vmatpush1.msra.mxu0 0.0
    %1624 = vmatprep.subr.mxu0 0.0
    %1625 = vmatpush1.msra.mxu0 0.0
    %1626 = vmatprep.subr.mxu0 0.0
    %1627 = vmatpush1.msra.mxu0 0.0
    %1628 = vmatprep.subr.mxu0 0.0
    %1629 = vmatpush1.msra.mxu0 0.0
    %1630 = vmatprep.subr.mxu0 0.0
    %1631 = vmatpush1.msra.mxu0 0.0
    %1632 = vmatprep.subr.mxu0 0.0
    %1633 = vmatpush1.msra.mxu0 0.0
    %1634 = vmatprep.subr.mxu0 0.0
    %1635 = vmatpush1.msra.mxu0 0.0
    %1636 = vmatprep.mubr.f32.mxu0 0.0
    %1637 = vmatmul.mubr.f32.gmra.mrb[0].mxu0 %v1563
    %v1638 = vpop.f32.mrb[0].mxu0
    %v1639 = vadd.f32 0.0, %v1638
    %v1640 = vpop.f32.mrb[0].mxu0
    %v1641 = vadd.f32 0.0, %v1640
    %1642 = vdwg.mxu0
    %1643 = vmatprep.subr.mxu0 %v446
    %1644 = vmatpush1.msra.mxu0 %v445
    %1645 = vmatprep.subr.mxu0 %v450
    %1646 = vmatpush1.msra.mxu0 %v449
    %1647 = vmatprep.subr.mxu0 %v454
    %1648 = vmatpush1.msra.mxu0 %v453
    %1649 = vmatprep.subr.mxu0 %v458
    %1650 = vmatpush1.msra.mxu0 %v457
    %1651 = vmatprep.subr.mxu0 %v462
    %1652 = vmatpush1.msra.mxu0 %v461
    %1653 = vmatprep.subr.mxu0 %v466
    %1654 = vmatpush1.msra.mxu0 %v465
    %1655 = vmatprep.subr.mxu0 %v470
    %1656 = vmatpush1.msra.mxu0 %v469
    %1657 = vmatprep.subr.mxu0 %v474
    %1658 = vmatpush1.msra.mxu0 %v473
    %1659 = vmatprep.subr.mxu0 %v478
    %1660 = vmatpush1.msra.mxu0 %v477
    %1661 = vmatprep.subr.mxu0 %v482
    %1662 = vmatpush1.msra.mxu0 %v481
    %1663 = vmatprep.subr.mxu0 %v486
    %1664 = vmatpush1.msra.mxu0 %v485
    %1665 = vmatprep.subr.mxu0 %v490
    %1666 = vmatpush1.msra.mxu0 %v489
    %1667 = vmatprep.subr.mxu0 %v494
    %1668 = vmatpush1.msra.mxu0 %v493
    %1669 = vmatprep.subr.mxu0 %v498
    %1670 = vmatpush1.msra.mxu0 %v497
    %1671 = vmatprep.subr.mxu0 %v502
    %1672 = vmatpush1.msra.mxu0 %v501
    %1673 = vmatprep.subr.mxu0 %v506
    %1674 = vmatpush1.msra.mxu0 %v505
    %1675 = vmatprep.subr.mxu0 0.0
    %1676 = vmatpush1.msra.mxu0 0.0
    %1677 = vmatprep.subr.mxu0 0.0
    %1678 = vmatpush1.msra.mxu0 0.0
    %1679 = vmatprep.subr.mxu0 0.0
    %1680 = vmatpush1.msra.mxu0 0.0
    %1681 = vmatprep.subr.mxu0 0.0
    %1682 = vmatpush1.msra.mxu0 0.0
    %1683 = vmatprep.subr.mxu0 0.0
    %1684 = vmatpush1.msra.mxu0 0.0
    %1685 = vmatprep.subr.mxu0 0.0
    %1686 = vmatpush1.msra.mxu0 0.0
    %1687 = vmatprep.subr.mxu0 0.0
    %1688 = vmatpush1.msra.mxu0 0.0
    %1689 = vmatprep.subr.mxu0 0.0
    %1690 = vmatpush1.msra.mxu0 0.0
    %1691 = vmatprep.subr.mxu0 0.0
    %1692 = vmatpush1.msra.mxu0 0.0
    %1693 = vmatprep.subr.mxu0 0.0
    %1694 = vmatpush1.msra.mxu0 0.0
    %1695 = vmatprep.subr.mxu0 0.0
    %1696 = vmatpush1.msra.mxu0 0.0
    %1697 = vmatprep.subr.mxu0 0.0
    %1698 = vmatpush1.msra.mxu0 0.0
    %1699 = vmatprep.subr.mxu0 0.0
    %1700 = vmatpush1.msra.mxu0 0.0
    %1701 = vmatprep.subr.mxu0 0.0
    %1702 = vmatpush1.msra.mxu0 0.0
    %1703 = vmatprep.subr.mxu0 0.0
    %1704 = vmatpush1.msra.mxu0 0.0
    %1705 = vmatprep.subr.mxu0 0.0
    %1706 = vmatpush1.msra.mxu0 0.0
    %1707 = vmatprep.mubr.f32.mxu0 0.0
    %1708 = vmatmul.mubr.f32.gmra.mrb[0].mxu0 %v1563
    %v1709 = vpop.f32.mrb[0].mxu0
    %v1710 = vadd.f32 0.0, %v1709
    %v1711 = vpop.f32.mrb[0].mxu0
    %v1712 = vadd.f32 0.0, %v1711
    %1713 = vdwg.mxu0
    %v1714 = vadd.f32 %v1568, %v1639
    %v1715 = vadd.f32 %v1569, %v1641
    %v1716 = vadd.f32 %v1570, %v1710
    %v1717 = vadd.f32 %v1571, %v1712
    %vm1718 = vcmp.ge.f32.partialorder %v1714, 0.0
    %vm1719 = vcmp.ge.f32.partialorder %v1715, 0.0
    %vm1720 = vcmp.ge.f32.partialorder %v1716, 0.0
    %vm1721 = vcmp.ge.f32.partialorder %v1717, 0.0
    %v1722 = vsel %vm1718, 1, 0
    %v1723 = vsel %vm1719, 1, 0
    %v1724 = vsel %vm1720, 1, 0
    %v1725 = vsel %vm1721, 1, 0
    %v1726 = vcvt.s32.f32 %v1722
    %v1727 = vcvt.s32.f32 %v1723
    %v1728 = vcvt.s32.f32 %v1724
    %v1729 = vcvt.s32.f32 %v1725
    %v1730 = vmul.f32 %v1564, %v1727
    %v1731 = vmul.f32 %v1726, %v1728
    %v1732 = vadd.f32 %v1730, %v1731
    %v1733 = vmul.f32 %v1732, %v1729
    %s1734 = sadd.s32 %s507, 6
    %p1735 = scmp.lt.s32.totalorder %s1734, 8
    %s1736 = scalar_select %p1735, 1, 0
    %v1737 = vstv %s1736
    %vm1738 = vcmp.eq.s32.totalorder %v1737, 1
    %v1739 = vsel %vm1738, %v1733, %v1563
    %v1740 = vsel %vm1738, %v1732, %v1564
    %s1741 = smul.u32 7, 4
    %s1742 = smul.addr %s1741, 8
    %s1743 = scalar_lea.vmem [#allocation4], %s1742
    %v1744 = vld [vmem:[%s1743] sm:$0xff]
    %v1745 = vld [vmem:[%s1743 + $0x8] sm:$0xff]
    %v1746 = vld [vmem:[%s1743 + $0x10] sm:$0xff]
    %v1747 = vld [vmem:[%s1743 + $0x18] sm:$0xff]
    %1748 = vmatprep.subr.mxu0 %v444
    %1749 = vmatpush1.msra.mxu0 %v443
    %1750 = vmatprep.subr.mxu0 %v448
    %1751 = vmatpush1.msra.mxu0 %v447
    %1752 = vmatprep.subr.mxu0 %v452
    %1753 = vmatpush1.msra.mxu0 %v451
    %1754 = vmatprep.subr.mxu0 %v456
    %1755 = vmatpush1.msra.mxu0 %v455
    %1756 = vmatprep.subr.mxu0 %v460
    %1757 = vmatpush1.msra.mxu0 %v459
    %1758 = vmatprep.subr.mxu0 %v464
    %1759 = vmatpush1.msra.mxu0 %v463
    %1760 = vmatprep.subr.mxu0 %v468
    %1761 = vmatpush1.msra.mxu0 %v467
    %1762 = vmatprep.subr.mxu0 %v472
    %1763 = vmatpush1.msra.mxu0 %v471
    %1764 = vmatprep.subr.mxu0 %v476
    %1765 = vmatpush1.msra.mxu0 %v475
    %1766 = vmatprep.subr.mxu0 %v480
    %1767 = vmatpush1.msra.mxu0 %v479
    %1768 = vmatprep.subr.mxu0 %v484
    %1769 = vmatpush1.msra.mxu0 %v483
    %1770 = vmatprep.subr.mxu0 %v488
    %1771 = vmatpush1.msra.mxu0 %v487
    %1772 = vmatprep.subr.mxu0 %v492
    %1773 = vmatpush1.msra.mxu0 %v491
    %1774 = vmatprep.subr.mxu0 %v496
    %1775 = vmatpush1.msra.mxu0 %v495
    %1776 = vmatprep.subr.mxu0 %v500
    %1777 = vmatpush1.msra.mxu0 %v499
    %1778 = vmatprep.subr.mxu0 %v504
    %1779 = vmatpush1.msra.mxu0 %v503
    %1780 = vmatprep.subr.mxu0 0.0
    %1781 = vmatpush1.msra.mxu0 0.0
    %1782 = vmatprep.subr.mxu0 0.0
    %1783 = vmatpush1.msra.mxu0 0.0
    %1784 = vmatprep.subr.mxu0 0.0
    %1785 = vmatpush1.msra.mxu0 0.0
    %1786 = vmatprep.subr.mxu0 0.0
    %1787 = vmatpush1.msra.mxu0 0.0
    %1788 = vmatprep.subr.mxu0 0.0
    %1789 = vmatpush1.msra.mxu0 0.0
    %1790 = vmatprep.subr.mxu0 0.0
    %1791 = vmatpush1.msra.mxu0 0.0
    %1792 = vmatprep.subr.mxu0 0.0
    %1793 = vmatpush1.msra.mxu0 0.0
    %1794 = vmatprep.subr.mxu0 0.0
    %1795 = vmatpush1.msra.mxu0 0.0
    %1796 = vmatprep.subr.mxu0 0.0
    %1797 = vmatpush1.msra.mxu0 0.0
    %1798 = vmatprep.subr.mxu0 0.0
    %1799 = vmatpush1.msra.mxu0 0.0
    %1800 = vmatprep.subr.mxu0 0.0
    %1801 = vmatpush1.msra.mxu0 0.0
    %1802 = vmatprep.subr.mxu0 0.0
    %1803 = vmatpush1.msra.mxu0 0.0
    %1804 = vmatprep.subr.mxu0 0.0
    %1805 = vmatpush1.msra.mxu0 0.0
    %1806 = vmatprep.subr.mxu0 0.0
    %1807 = vmatpush1.msra.mxu0 0.0
    %1808 = vmatprep.subr.mxu0 0.0
    %1809 = vmatpush1.msra.mxu0 0.0
    %1810 = vmatprep.subr.mxu0 0.0
    %1811 = vmatpush1.msra.mxu0 0.0
    %1812 = vmatprep.mubr.f32.mxu0 0.0
    %1813 = vmatmul.mubr.f32.gmra.mrb[0].mxu0 %v1739
    %v1814 = vpop.f32.mrb[0].mxu0
    %v1815 = vadd.f32 0.0, %v1814
    %v1816 = vpop.f32.mrb[0].mxu0
    %v1817 = vadd.f32 0.0, %v1816
    %1818 = vdwg.mxu0
    %1819 = vmatprep.subr.mxu0 %v446
    %1820 = vmatpush1.msra.mxu0 %v445
    %1821 = vmatprep.subr.mxu0 %v450
    %1822 = vmatpush1.msra.mxu0 %v449
    %1823 = vmatprep.subr.mxu0 %v454
    %1824 = vmatpush1.msra.mxu0 %v453
    %1825 = vmatprep.subr.mxu0 %v458
    %1826 = vmatpush1.msra.mxu0 %v457
    %1827 = vmatprep.subr.mxu0 %v462
    %1828 = vmatpush1.msra.mxu0 %v461
    %1829 = vmatprep.subr.mxu0 %v466
    %1830 = vmatpush1.msra.mxu0 %v465
    %1831 = vmatprep.subr.mxu0 %v470
    %1832 = vmatpush1.msra.mxu0 %v469
    %1833 = vmatprep.subr.mxu0 %v474
    %1834 = vmatpush1.msra.mxu0 %v473
    %1835 = vmatprep.subr.mxu0 %v478
    %1836 = vmatpush1.msra.mxu0 %v477
    %1837 = vmatprep.subr.mxu0 %v482
    %1838 = vmatpush1.msra.mxu0 %v481
    %1839 = vmatprep.subr.mxu0 %v486
    %1840 = vmatpush1.msra.mxu0 %v485
    %1841 = vmatprep.subr.mxu0 %v490
    %1842 = vmatpush1.msra.mxu0 %v489
    %1843 = vmatprep.subr.mxu0 %v494
    %1844 = vmatpush1.msra.mxu0 %v493
    %1845 = vmatprep.subr.mxu0 %v498
    %1846 = vmatpush1.msra.mxu0 %v497
    %1847 = vmatprep.subr.mxu0 %v502
    %1848 = vmatpush1.msra.mxu0 %v501
    %1849 = vmatprep.subr.mxu0 %v506
    %1850 = vmatpush1.msra.mxu0 %v505
    %1851 = vmatprep.subr.mxu0 0.0
    %1852 = vmatpush1.msra.mxu0 0.0
    %1853 = vmatprep.subr.mxu0 0.0
    %1854 = vmatpush1.msra.mxu0 0.0
    %1855 = vmatprep.subr.mxu0 0.0
    %1856 = vmatpush1.msra.mxu0 0.0
    %1857 = vmatprep.subr.mxu0 0.0
    %1858 = vmatpush1.msra.mxu0 0.0
    %1859 = vmatprep.subr.mxu0 0.0
    %1860 = vmatpush1.msra.mxu0 0.0
    %1861 = vmatprep.subr.mxu0 0.0
    %1862 = vmatpush1.msra.mxu0 0.0
    %1863 = vmatprep.subr.mxu0 0.0
    %1864 = vmatpush1.msra.mxu0 0.0
    %1865 = vmatprep.subr.mxu0 0.0
    %1866 = vmatpush1.msra.mxu0 0.0
    %1867 = vmatprep.subr.mxu0 0.0
    %1868 = vmatpush1.msra.mxu0 0.0
    %1869 = vmatprep.subr.mxu0 0.0
    %1870 = vmatpush1.msra.mxu0 0.0
    %1871 = vmatprep.subr.mxu0 0.0
    %1872 = vmatpush1.msra.mxu0 0.0
    %1873 = vmatprep.subr.mxu0 0.0
    %1874 = vmatpush1.msra.mxu0 0.0
    %1875 = vmatprep.subr.mxu0 0.0
    %1876 = vmatpush1.msra.mxu0 0.0
    %1877 = vmatprep.subr.mxu0 0.0
    %1878 = vmatpush1.msra.mxu0 0.0
    %1879 = vmatprep.subr.mxu0 0.0
    %1880 = vmatpush1.msra.mxu0 0.0
    %1881 = vmatprep.subr.mxu0 0.0
    %1882 = vmatpush1.msra.mxu0 0.0
    %1883 = vmatprep.mubr.f32.mxu0 0.0
    %1884 = vmatmul.mubr.f32.gmra.mrb[0].mxu0 %v1739
    %v1885 = vpop.f32.mrb[0].mxu0
    %v1886 = vadd.f32 0.0, %v1885
    %v1887 = vpop.f32.mrb[0].mxu0
    %v1888 = vadd.f32 0.0, %v1887
    %1889 = vdwg.mxu0
    %v1890 = vadd.f32 %v1744, %v1815
    %v1891 = vadd.f32 %v1745, %v1817
    %v1892 = vadd.f32 %v1746, %v1886
    %v1893 = vadd.f32 %v1747, %v1888
    %vm1894 = vcmp.ge.f32.partialorder %v1890, 0.0
    %vm1895 = vcmp.ge.f32.partialorder %v1891, 0.0
    %vm1896 = vcmp.ge.f32.partialorder %v1892, 0.0
    %vm1897 = vcmp.ge.f32.partialorder %v1893, 0.0
    %v1898 = vsel %vm1894, 1, 0
    %v1899 = vsel %vm1895, 1, 0
    %v1900 = vsel %vm1896, 1, 0
    %v1901 = vsel %vm1897, 1, 0
    %v1902 = vcvt.s32.f32 %v1898
    %v1903 = vcvt.s32.f32 %v1899
    %v1904 = vcvt.s32.f32 %v1900
    %v1905 = vcvt.s32.f32 %v1901
    %v1906 = vmul.f32 %v1740, %v1903
    %v1907 = vmul.f32 %v1902, %v1904
    %v1908 = vadd.f32 %v1906, %v1907
    %v1909 = vmul.f32 %v1908, %v1905
    %s1910 = sadd.s32 %s507, 7
    %p1911 = scmp.lt.s32.totalorder %s1910, 8
    %s1912 = scalar_select %p1911, 1, 0
    %v1913 = vstv %s1912
    %vm1914 = vcmp.eq.s32.totalorder %v1913, 1
    %v1915 = vsel %vm1914, %v1909, %v1739
    %v1916 = vsel %vm1914, %v1908, %v1740
    %1917 = vst [vmem:[#allocation2] sm:$0xff] %v1915
    %1918 = vst [vmem:[#allocation3] sm:$0xff] %v1916
    // Predicated region
    $region46: #{tpu_custom_call.1} parent=1 // pred_check
      %p1919 = pneg %p85
    $region47: #{tpu_custom_call.1} parent=1 // pred_check_branch
      %1921 = sbr.rel (%p1919) target = $region49
    $region48: #{tpu_custom_call.1} parent=1 // pred_region
      %v1922 = vld [vmem:[#allocation11] sm:$0xff]
      %v1923 = vld [vmem:[#allocation11 + $0x8] sm:$0xff]
      %v1924 = vld [vmem:[#allocation11 + $0x10] sm:$0xff]
      %v1925 = vld [vmem:[#allocation11 + $0x18] sm:$0xff]
      %v1926 = vld [vmem:[#allocation11 + $0x20] sm:$0xff]
      %v1927 = vld [vmem:[#allocation11 + $0x28] sm:$0xff]
      %v1928 = vld [vmem:[#allocation11 + $0x30] sm:$0xff]
      %v1929 = vld [vmem:[#allocation11 + $0x38] sm:$0xff]
      %v1930 = vld [vmem:[#allocation11 + $0x40] sm:$0xff]
      %v1931 = vld [vmem:[#allocation11 + $0x48] sm:$0xff]
      %v1932 = vld [vmem:[#allocation11 + $0x50] sm:$0xff]
      %v1933 = vld [vmem:[#allocation11 + $0x58] sm:$0xff]
      %v1934 = vld [vmem:[#allocation11 + $0x60] sm:$0xff]
      %v1935 = vld [vmem:[#allocation11 + $0x68] sm:$0xff]
      %v1936 = vld [vmem:[#allocation11 + $0x70] sm:$0xff]
      %v1937 = vld [vmem:[#allocation11 + $0x78] sm:$0xff]
      %v1938 = vld [vmem:[%s5] sm:$0x1]
      %v1940 = vlaneseq
      %v1941 = vshrl.u32 %v1940, 7
      %v1942 = vsub.s32 0, %v1941
      %v1943 = vrot.slane %v1938, %v1942
      %1945 = vmatprep.subr.mxu0 0.0
      %1946 = vmatpush1.msra.mxu0 %v1922
      %1947 = vmatprep.subr.mxu0 0.0
      %1948 = vmatpush1.msra.mxu0 %v1923
      %1949 = vmatprep.subr.mxu0 0.0
      %1950 = vmatpush1.msra.mxu0 %v1924
      %1951 = vmatprep.subr.mxu0 0.0
      %1952 = vmatpush1.msra.mxu0 %v1925
      %1953 = vmatprep.subr.mxu0 0.0
      %1954 = vmatpush1.msra.mxu0 %v1926
      %1955 = vmatprep.subr.mxu0 0.0
      %1956 = vmatpush1.msra.mxu0 %v1927
      %1957 = vmatprep.subr.mxu0 0.0
      %1958 = vmatpush1.msra.mxu0 %v1928
      %1959 = vmatprep.subr.mxu0 0.0
      %1960 = vmatpush1.msra.mxu0 %v1929
      %1961 = vmatprep.subr.mxu0 0.0
      %1962 = vmatpush1.msra.mxu0 %v1930
      %1963 = vmatprep.subr.mxu0 0.0
      %1964 = vmatpush1.msra.mxu0 %v1931
      %1965 = vmatprep.subr.mxu0 0.0
      %1966 = vmatpush1.msra.mxu0 %v1932
      %1967 = vmatprep.subr.mxu0 0.0
      %1968 = vmatpush1.msra.mxu0 %v1933
      %1969 = vmatprep.subr.mxu0 0.0
      %1970 = vmatpush1.msra.mxu0 %v1934
      %1971 = vmatprep.subr.mxu0 0.0
      %1972 = vmatpush1.msra.mxu0 %v1935
      %1973 = vmatprep.subr.mxu0 0.0
      %1974 = vmatpush1.msra.mxu0 %v1936
      %1975 = vmatprep.subr.mxu0 0.0
      %1976 = vmatpush1.msra.mxu0 %v1937
      %1977 = vmatprep.subr.mxu0 0.0
      %1978 = vmatpush1.msra.mxu0 0.0
      %1979 = vmatprep.subr.mxu0 0.0
      %1980 = vmatpush1.msra.mxu0 0.0
      %1981 = vmatprep.subr.mxu0 0.0
      %1982 = vmatpush1.msra.mxu0 0.0
      %1983 = vmatprep.subr.mxu0 0.0
      %1984 = vmatpush1.msra.mxu0 0.0
      %1985 = vmatprep.subr.mxu0 0.0
      %1986 = vmatpush1.msra.mxu0 0.0
      %1987 = vmatprep.subr.mxu0 0.0
      %1988 = vmatpush1.msra.mxu0 0.0
      %1989 = vmatprep.subr.mxu0 0.0
      %1990 = vmatpush1.msra.mxu0 0.0
      %1991 = vmatprep.subr.mxu0 0.0
      %1992 = vmatpush1.msra.mxu0 0.0
      %1993 = vmatprep.subr.mxu0 0.0
      %1994 = vmatpush1.msra.mxu0 0.0
      %1995 = vmatprep.subr.mxu0 0.0
      %1996 = vmatpush1.msra.mxu0 0.0
      %1997 = vmatprep.subr.mxu0 0.0
      %1998 = vmatpush1.msra.mxu0 0.0
      %1999 = vmatprep.subr.mxu0 0.0
      %2000 = vmatpush1.msra.mxu0 0.0
      %2001 = vmatprep.subr.mxu0 0.0
      %2002 = vmatpush1.msra.mxu0 0.0
      %2003 = vmatprep.subr.mxu0 0.0
      %2004 = vmatpush1.msra.mxu0 0.0
      %2005 = vmatprep.subr.mxu0 0.0
      %2006 = vmatpush1.msra.mxu0 0.0
      %2007 = vmatprep.subr.mxu0 0.0
      %2008 = vmatpush1.msra.mxu0 0.0
      %2009 = vmatprep.mubr.f32.mxu0 0.0
      %2010 = vmatmul.mubr.f32.gmra.mrb[0].mxu0 %v1915
      %v2011 = vpop.f32.mrb[0].mxu0
      %v2012 = vadd.f32 %v1943, %v2011
      %v2013 = vpop.f32.mrb[0].mxu0
      %2014 = vdwg.mxu0
      %v2015 = vlaneseq
      %v2016 = vand.u32 %v2015, 127
      %vm2017 = vcmp.lt.s32.totalorder %v2016, 10
      %v2018 = vsel %vm2017, %v2012, -inf
      %2019 = vmax.xlane.f32.xlu0 %v2018
      %v2020 = vpop.xlane.xlu0 %2019
      %v2021 = vsub.f32 %v2018, %v2020
      %v2022 = vmul.f32 %v2021, 1.442695
      %v2023 = vpow.pop %v2022
      %2024 = vadd.xlane.f32.xlu0 %v2023
      %v2025 = vpop.xlane.xlu0 %2024
      %v2026 = vrcp.pop %v2025
      %v2027 = vmul.f32 %v2023, %v2026
      %2028 = vst [vmem:[#allocation13] sm:$0xff] %v2027
    $region49: #{tpu_custom_call.1} parent=1 // pred_fallthru
      _
    // Predicated region
    $region50: #{tpu_custom_call.1} parent=1 // pred_check
      _
    $region51: #{tpu_custom_call.1} parent=1 // pred_check_branch
      %2030 = sbr.rel (0) target = $region53
    $region52: #{tpu_custom_call.1} parent=1 // pred_region
      %s2032 = ssub.s32 128, 128
      %2033 = vsyncadd [#allocation7], %s2032
      %s2035 = sshll.u32 [#allocation13], 4
      %s2036 = int_to_ptr.vmem [resolvable:$true] %s2035
      %2038 = dma.vmem_to_hbm [thread:$0]  %s2036, 128, %s6, [#allocation7]
    $region53: #{tpu_custom_call.1} parent=1 // pred_fallthru
      _
    // Predicated region
    $region54: #{tpu_custom_call.1} parent=1 // pred_check
      _
    $region55: #{tpu_custom_call.1} parent=1 // pred_check_branch
      %2040 = sbr.rel (0) target = $region57
    $region56: #{tpu_custom_call.1} parent=1 // pred_region
      %2041 = dma.done [#allocation7], 128
    $region57: #{tpu_custom_call.1} parent=1 // pred_fallthru
      _
    %2042 = vsyncpa [#allocation6], 1
    %2043 = vsyncpa [#allocation9], 1
    %2044 = vsyncpa [#allocation12], 1
    %2045 = vsyncpa [#allocation7], 1

</llo_original>
